<compile_context>
chip_gen: v7x
topology: tpu7x:2x2x1
jax: 0.10.0
libtpu: 0.0.40
codegen_flags: <defaults>
</compile_context>

<pallas_src>
import functools

import jax
import jax.numpy as jnp
from jax.experimental import pallas as pl
from jax.experimental.pallas import tpu as pltpu

KERNEL = 5                       # first Conv1d kernel size (odd)
PAD = (KERNEL - 1) // 2 + 1      # ReplicationPad1d amount per side (= 3)
K2 = 3                           # second Conv1d kernel size
NEG_SLOPE = 0.01                 # LeakyReLU negative slope
MATMUL_DTYPE = jnp.bfloat16      # MXU-native operand dtype (f32 accumulation)


# --------------------------------------------------------------------------
# Init-time parameter packing (done once per model, outside the forward)
# --------------------------------------------------------------------------
def _kron_eye(w, P):
    """(K, Cin, Cout) -> (K, P*Cin, P*Cout): block-diag replication over P
    lane-packed samples (weights are batch-invariant)."""
    K, Cin, Cout = w.shape
    eye = jnp.eye(P, dtype=w.dtype)
    return jnp.einsum('pq,kio->kpiqo', eye, w).reshape(K, P * Cin, P * Cout)


def _pair_weights(w_a, w_b, P):
    """Two branches -> (K, 2*P*Cin, 2*P*Cout): branch A acts on the first lane
    half, branch B on the second, each block-diag over P samples."""
    wa = _kron_eye(w_a, P)
    wb = _kron_eye(w_b, P)
    K, PCin, PCout = wa.shape
    z = jnp.zeros((K, PCin, PCout), wa.dtype)
    top = jnp.concatenate([wa, z], axis=-1)
    bot = jnp.concatenate([z, wb], axis=-1)
    return jnp.concatenate([top, bot], axis=1)      # (K, 2*PCin, 2*PCout)


def _pair_bias(b_a, b_b, P):
    return jnp.concatenate([jnp.tile(b_a, P), jnp.tile(b_b, P)])


def pick_samples_per_step(B, C, lane_target=128, max_lanes=512, min_steps=4):
    """Pick P = samples lane-packed per grid step (a divisor of B).

    Prefers (in order): lane width 2*P*C a multiple of 128 (dense stores, full
    vregs), at least `min_steps` grid steps (pipeline prefetch; >=2 per v7x
    TensorCore), lanes <= max_lanes (VMEM at real widths), then fatter steps.
    """
    del lane_target  # folded into the %128 criterion
    divs = [p for p in range(1, B + 1) if B % p == 0]

    def score(p):
        lanes = 2 * p * C
        return (lanes % 128 == 0,
                (B // p) >= min_steps,
                lanes <= max_lanes,
                lanes)

    return max(divs, key=score)


def pack_interactor_params(w1, b1, w2, b2, P):
    """One-time packing.  Branch order: 0=phi, 1=psi, 2=U, 3=P.
    w1: (4, KERNEL, C, H), b1: (4, H), w2: (4, K2, H, C), b2: (4, C).
    Pair 0 = (phi, psi); pair 1 = (U, -P): the P branch's final conv is
    negated so tanh(-x) = -tanh(x) bakes the minus of `d - P(c)` into p1."""
    w1p = jnp.stack([_pair_weights(w1[0], w1[1], P),
                     _pair_weights(w1[2], w1[3], P)]).astype(MATMUL_DTYPE)
    w2p = jnp.stack([_pair_weights(w2[0], w2[1], P),
                     _pair_weights(w2[2], -w2[3], P)]).astype(MATMUL_DTYPE)
    b1p = jnp.stack([_pair_bias(b1[0], b1[1], P),
                     _pair_bias(b1[2], b1[3], P)])[:, None, :]     # (2, 1, Wh) f32
    b2p = jnp.stack([_pair_bias(b2[0], b2[1], P),
                     _pair_bias(b2[2], -b2[3], P)])[:, None, :]    # (2, 1, W)  f32
    return w1p, b1p, w2p, b2p


def _vmem_limit_bytes(L, Lpad, W, Wh):
    """Generous per-generation-safe scoped-VMEM budget from the real buffers."""
    f32, bf16 = 4, 2
    tiles = 2 * (Lpad * W * bf16 + L * W * f32 + L * W * f32)   # double-buffered x/xpad/out
    weights = 2 * (2 * KERNEL * W * Wh * bf16 + 2 * Wh * f32
                   + 2 * K2 * Wh * W * bf16 + 2 * W * f32)
    interm = 16 * Lpad * max(W, Wh) * f32                       # acc/h/dc/p0/p1/rolls headroom
    est = tiles + weights + interm
    # Cap at 64 MiB so it is legal on v7x; on v5e/v6e this can go to 96-128 MiB.
    return int(min(64 * 2**20, max(16 * 2**20, 8 * est)))


# --------------------------------------------------------------------------
# Forward
# --------------------------------------------------------------------------
@functools.partial(jax.jit, static_argnames=("C", "P"))
def interactor_level(x, packed, *, C, P):
    """x: (B, T, C) f32, channels-last (matches the module's input layout).
    Returns (x_even_update, x_odd_update), each (B, T//2, C) f32.  groups=1."""
    w1p, b1p, w2p, b2p = packed
    B, T, Cx = x.shape
    assert Cx == C, "channel mismatch between x and packed params"
    assert T % 2 == 0, "sequence length must be even for the even/odd split"
    assert B % P == 0, "batch must be divisible by the lane-packing factor P"

    L = T // 2
    Lpad = L + 2 * PAD
    L1 = L + 2 * PAD - (KERNEL - 1)          # conv1 output length (= L + 2)
    W = 2 * P * C                            # lane width of the packed tile
    Wh = w1p.shape[-1]                       # = 2 * P * H
    G = B // P                               # grid steps
    assert w1p.shape == (2, KERNEL, W, Wh) and w2p.shape == (2, K2, Wh, W)

    # ---- plain-JAX glue: even/odd split, lane packing, replication pad ----
    x_even = x[:, 0::2, :]                   # (B, L, C)
    x_odd = x[:, 1::2, :]

    def group_pack(xs):                      # (B, L, C) -> (G, L, P*C)
        return xs.reshape(G, P, L, C).transpose(0, 2, 1, 3).reshape(G, L, P * C)

    x_pack = jnp.concatenate([group_pack(x_even), group_pack(x_odd)],
                             axis=-1)        # (G, L, W) f32, lanes [even | odd]
    xpad = jnp.concatenate([jnp.repeat(x_pack[:, :1, :], PAD, axis=1),
                            x_pack,
                            jnp.repeat(x_pack[:, -1:, :], PAD, axis=1)],
                           axis=1)           # (G, Lpad, W)
    xpad_bf = xpad.astype(MATMUL_DTYPE)      # bf16 once, BEFORE any tap slicing

    # ---------------------------- kernel -----------------------------------
    def kernel(xpad_ref, x_ref, w1_ref, b1_ref, w2_ref, b2_ref, out_ref):
        xpad_t = xpad_ref[0]                 # (Lpad, W) bf16
        x_t = x_ref[0]                       # (L, W)    f32

        def branch_pair(inp_pad_bf, pair):
            # Conv1d(k=5): per-tap matmuls, f32 accumulation (no im2col buffer).
            acc = jnp.dot(inp_pad_bf[0:L1, :], w1_ref[pair, 0],
                          preferred_element_type=jnp.float32)
            for k in range(1, KERNEL):
                acc = acc + jnp.dot(inp_pad_bf[k:k + L1, :], w1_ref[pair, k],
                                    preferred_element_type=jnp.float32)
            h = acc + b1_ref[pair]                       # (L1, Wh)
            h = jnp.where(h > 0, h, NEG_SLOPE * h)       # LeakyReLU(0.01)
            # TODO(synk): nn.Dropout(p) is identity in eval mode; training-mode
            # dropout is not implemented.
            hb = h.astype(MATMUL_DTYPE)                  # cast once before taps
            # Conv1d(k=3): per-tap matmuls.
            acc2 = jnp.dot(hb[0:L, :], w2_ref[pair, 0],
                           preferred_element_type=jnp.float32)
            for k in range(1, K2):
                acc2 = acc2 + jnp.dot(hb[k:k + L, :], w2_ref[pair, k],
                                      preferred_element_type=jnp.float32)
            return jnp.tanh(acc2 + b2_ref[pair])         # (L, W)

        # pair 0: [phi(x_even) | psi(x_odd)]
        p0 = branch_pair(xpad_t, 0)
        g = jnp.exp(p0)
        # half swap on the XLU: roll by W/2 turns [even|odd] into [odd|even]
        dc = pltpu.roll(x_t, shift=W // 2, axis=1) * g   # [d | c], f32

        # replication pad of dc for pair 1 (one 3-way concat per grid step).
        dc_bf = dc.astype(MATMUL_DTYPE)
        dc_pad = jnp.concatenate(
            [jnp.broadcast_to(dc_bf[0:1, :], (PAD, W)),
             dc_bf,
             jnp.broadcast_to(dc_bf[L - 1:L, :], (PAD, W))], axis=0)

        # pair 1: [U(d) | -P(c)]  (P's final conv pre-negated in packing)
        p1 = branch_pair(dc_pad, 1)
        # [c + U(d) | d - P(c)] = [x_even_update | x_odd_update]
        out_ref[0] = pltpu.roll(dc, shift=W // 2, axis=1) + p1

    def const_spec(shape):
        nd = len(shape)
        return pl.BlockSpec(shape, lambda i, _n=nd: (0,) * _n)

    out = pl.pallas_call(
        kernel,
        out_shape=jax.ShapeDtypeStruct((G, L, W), jnp.float32),
        grid=(G,),
        in_specs=[
            pl.BlockSpec((1, Lpad, W), lambda i: (i, 0, 0)),   # padded x, bf16
            pl.BlockSpec((1, L, W), lambda i: (i, 0, 0)),      # x, f32
            const_spec(w1p.shape), const_spec(b1p.shape),
            const_spec(w2p.shape), const_spec(b2p.shape),
        ],
        out_specs=pl.BlockSpec((1, L, W), lambda i: (i, 0, 0)),
        compiler_params=pltpu.CompilerParams(
            dimension_semantics=("parallel",),                 # batch grid axis
            vmem_limit_bytes=_vmem_limit_bytes(L, Lpad, W, Wh)),
    )(xpad_bf, x_pack, w1p, b1p, w2p, b2p)

    # ---- unpack the lane-dense slab back to (B, L, C) per output ----------
    out = out.reshape(G, L, 2, P, C).transpose(2, 0, 3, 1, 4)  # (2, G, P, L, C)
    x_even_update = out[0].reshape(B, L, C)
    x_odd_update = out[1].reshape(B, L, C)
    return x_even_update, x_odd_update
    # TODO(synk): groups > 1 (grouped Conv1d) not implemented; groups=1 assumed.


# --------------------------------------------------------------------------
# Pure-JAX reference (f32 everywhere) for correctness checking
# --------------------------------------------------------------------------
def _branch_ref(inp, w1_b, b1_b, w2_b, b2_b):
    # inp: (B, L, C); w1_b: (KERNEL, C, H); b1_b: (H,); w2_b: (K2, H, C); b2_b: (C,)
    Bs, L, _ = inp.shape
    xpad = jnp.concatenate([jnp.repeat(inp[:, :1, :], PAD, axis=1),
                            inp,
                            jnp.repeat(inp[:, -1:, :], PAD, axis=1)], axis=1)
    L1 = L + 2 * PAD - (KERNEL - 1)
    h = jnp.zeros((Bs, L1, w1_b.shape[-1]), jnp.float32) + b1_b
    for k in range(KERNEL):
        h = h + jnp.einsum('blc,ch->blh', xpad[:, k:k + L1, :], w1_b[k])
    h = jnp.where(h > 0, h, NEG_SLOPE * h)
    L2 = L1 - (K2 - 1)
    o = jnp.zeros((Bs, L2, w2_b.shape[-1]), jnp.float32) + b2_b
    for k in range(K2):
        o = o + jnp.einsum('blh,hc->blc', h[:, k:k + L2, :], w2_b[k])
    return jnp.tanh(o)


def interactor_level_ref(x, w1, b1, w2, b2):
    xe = x[:, ::2, :]
    xo = x[:, 1::2, :]
    d = xo * jnp.exp(_branch_ref(xe, w1[0], b1[0], w2[0], b2[0]))
    c = xe * jnp.exp(_branch_ref(xo, w1[1], b1[1], w2[1], b2[1]))
    even = c + _branch_ref(d, w1[2], b1[2], w2[2], b2[2])
    odd = d - _branch_ref(c, w1[3], b1[3], w2[3], b2[3])
    return even, odd


if __name__ == "__main__":
    # Small but representative shapes: enough batch to lane-pack to 128 lanes
    # AND keep 4 grid steps (2 per v7x TensorCore).
    B, T, C = 64, 16, 4          # batch, sequence length, in_planes
    hidden_size = 1
    H = C * hidden_size

    key = jax.random.PRNGKey(0)
    kx, k1, k2, k3, k4 = jax.random.split(key, 5)

    x = jax.random.normal(kx, (B, T, C), dtype=jnp.float32)
    # 4 branches (phi, psi, U, P), each: Conv1d(C->H, k=5) + Conv1d(H->C, k=3)
    # w1[b, k, i, o] corresponds to PyTorch conv1.weight[o, i, k] of branch b.
    w1 = 0.1 * jax.random.normal(k1, (4, KERNEL, C, H), dtype=jnp.float32)
    b1 = 0.1 * jax.random.normal(k2, (4, H), dtype=jnp.float32)
    w2 = 0.1 * jax.random.normal(k3, (4, K2, H, C), dtype=jnp.float32)
    b2 = 0.1 * jax.random.normal(k4, (4, C), dtype=jnp.float32)

    # "Init-time" choices: lane-packing factor and packed/block-diag weights.
    P = pick_samples_per_step(B, C)              # -> 16 (128 lanes, 4 grid steps)
    packed = pack_interactor_params(w1, b1, w2, b2, P)

    even_upd, odd_upd = interactor_level(x, packed, C=C, P=P)
    jax.block_until_ready((even_upd, odd_upd))

    even_ref, odd_ref = interactor_level_ref(x, w1, b1, w2, b2)
    assert even_upd.shape == (B, T // 2, C) and odd_upd.shape == (B, T // 2, C)
    # bf16 MXU operands with f32 accumulation -> ~1e-2-level tolerance
    # (documented numerics decision; elementwise exp/mul/add paths stay f32).
    err_e = float(jnp.max(jnp.abs(even_upd - even_ref)))
    err_o = float(jnp.max(jnp.abs(odd_upd - odd_ref)))
    assert jnp.allclose(even_upd, even_ref, rtol=3e-2, atol=3e-2), err_e
    assert jnp.allclose(odd_upd, odd_ref, rtol=3e-2, atol=3e-2), err_o

    print("KERNEL_OK")
</pallas_src>

<mosaic_0001>
module attributes {stable_mosaic.version = 11 : i64} {
  func.func @kernel(%arg0: i32, %arg1: memref<1x14x128xbf16, #tpu.memory_space<vmem>>, %arg2: memref<1x8x128xf32, #tpu.memory_space<vmem>>, %arg3: memref<2x5x128x128xbf16, #tpu.memory_space<vmem>>, %arg4: memref<2x1x128xf32, #tpu.memory_space<vmem>>, %arg5: memref<2x3x128x128xbf16, #tpu.memory_space<vmem>>, %arg6: memref<2x1x128xf32, #tpu.memory_space<vmem>>, %arg7: memref<1x8x128xf32, #tpu.memory_space<vmem>>) attributes {dimension_semantics = [#tpu.dimension_semantics<parallel>], iteration_bounds = array<i64: 4>, scalar_prefetch = 0 : i64, scratch_operands = 0 : i64, tpu.core_type = #tpu.core_type<tc>, window_params = [{transform_indices = @transform_0, window_bounds = array<i64: 1, 14, 128>}, {transform_indices = @transform_1, window_bounds = array<i64: 1, 8, 128>}, {pipeline_mode = #tpu.pipeline_mode<synchronous>, transform_indices = @transform_2, window_bounds = array<i64: 2, 5, 128, 128>}, {pipeline_mode = #tpu.pipeline_mode<synchronous>, transform_indices = @transform_3, window_bounds = array<i64: 2, 1, 128>}, {pipeline_mode = #tpu.pipeline_mode<synchronous>, transform_indices = @transform_4, window_bounds = array<i64: 2, 3, 128, 128>}, {pipeline_mode = #tpu.pipeline_mode<synchronous>, transform_indices = @transform_5, window_bounds = array<i64: 2, 1, 128>}, {transform_indices = @transform_6, window_bounds = array<i64: 1, 8, 128>}]} {
    %c0 = arith.constant 0 : index
    %c0_0 = arith.constant 0 : index
    %c0_1 = arith.constant 0 : index
    %0 = vector.load %arg1[%c0, %c0_0, %c0_1] : memref<1x14x128xbf16, #tpu.memory_space<vmem>>, vector<1x14x128xbf16>
    %1 = vector.shape_cast %0 : vector<1x14x128xbf16> to vector<14x128xbf16>
    %c0_2 = arith.constant 0 : index
    %c0_3 = arith.constant 0 : index
    %c0_4 = arith.constant 0 : index
    %2 = vector.load %arg2[%c0_2, %c0_3, %c0_4] : memref<1x8x128xf32, #tpu.memory_space<vmem>>, vector<1x8x128xf32>
    %3 = vector.shape_cast %2 : vector<1x8x128xf32> to vector<8x128xf32>
    %4 = vector.extract_strided_slice %1 {offsets = [0, 0], sizes = [10, 128], strides = [1, 1]} : vector<14x128xbf16> to vector<10x128xbf16>
    %c0_5 = arith.constant 0 : index
    %c0_6 = arith.constant 0 : index
    %c0_7 = arith.constant 0 : index
    %c0_8 = arith.constant 0 : index
    %5 = vector.load %arg3[%c0_5, %c0_6, %c0_7, %c0_8] : memref<2x5x128x128xbf16, #tpu.memory_space<vmem>>, vector<1x1x128x128xbf16>
    %6 = vector.shape_cast %5 : vector<1x1x128x128xbf16> to vector<128x128xbf16>
    %cst = arith.constant dense<0.000000e+00> : vector<10x128xf32>
    %7 = tpu.matmul %4, %6, %cst {dimension_numbers = #tpu.dot_dimension_numbers<[1], [0], [0], [1], [0, 0, 1, 1], [], []>} : vector<10x128xbf16>, vector<128x128xbf16>, vector<10x128xf32> -> vector<10x128xf32>
    %8 = vector.extract_strided_slice %1 {offsets = [1, 0], sizes = [10, 128], strides = [1, 1]} : vector<14x128xbf16> to vector<10x128xbf16>
    %c0_9 = arith.constant 0 : index
    %c1 = arith.constant 1 : index
    %c0_10 = arith.constant 0 : index
    %c0_11 = arith.constant 0 : index
    %9 = vector.load %arg3[%c0_9, %c1, %c0_10, %c0_11] : memref<2x5x128x128xbf16, #tpu.memory_space<vmem>>, vector<1x1x128x128xbf16>
    %10 = vector.shape_cast %9 : vector<1x1x128x128xbf16> to vector<128x128xbf16>
    %cst_12 = arith.constant dense<0.000000e+00> : vector<10x128xf32>
    %11 = tpu.matmul %8, %10, %cst_12 {dimension_numbers = #tpu.dot_dimension_numbers<[1], [0], [0], [1], [0, 0, 1, 1], [], []>} : vector<10x128xbf16>, vector<128x128xbf16>, vector<10x128xf32> -> vector<10x128xf32>
    %12 = arith.addf %7, %11 : vector<10x128xf32>
    %13 = vector.extract_strided_slice %1 {offsets = [2, 0], sizes = [10, 128], strides = [1, 1]} : vector<14x128xbf16> to vector<10x128xbf16>
    %c0_13 = arith.constant 0 : index
    %c2 = arith.constant 2 : index
    %c0_14 = arith.constant 0 : index
    %c0_15 = arith.constant 0 : index
    %14 = vector.load %arg3[%c0_13, %c2, %c0_14, %c0_15] : memref<2x5x128x128xbf16, #tpu.memory_space<vmem>>, vector<1x1x128x128xbf16>
    %15 = vector.shape_cast %14 : vector<1x1x128x128xbf16> to vector<128x128xbf16>
    %cst_16 = arith.constant dense<0.000000e+00> : vector<10x128xf32>
    %16 = tpu.matmul %13, %15, %cst_16 {dimension_numbers = #tpu.dot_dimension_numbers<[1], [0], [0], [1], [0, 0, 1, 1], [], []>} : vector<10x128xbf16>, vector<128x128xbf16>, vector<10x128xf32> -> vector<10x128xf32>
    %17 = arith.addf %12, %16 : vector<10x128xf32>
    %18 = vector.extract_strided_slice %1 {offsets = [3, 0], sizes = [10, 128], strides = [1, 1]} : vector<14x128xbf16> to vector<10x128xbf16>
    %c0_17 = arith.constant 0 : index
    %c3 = arith.constant 3 : index
    %c0_18 = arith.constant 0 : index
    %c0_19 = arith.constant 0 : index
    %19 = vector.load %arg3[%c0_17, %c3, %c0_18, %c0_19] : memref<2x5x128x128xbf16, #tpu.memory_space<vmem>>, vector<1x1x128x128xbf16>
    %20 = vector.shape_cast %19 : vector<1x1x128x128xbf16> to vector<128x128xbf16>
    %cst_20 = arith.constant dense<0.000000e+00> : vector<10x128xf32>
    %21 = tpu.matmul %18, %20, %cst_20 {dimension_numbers = #tpu.dot_dimension_numbers<[1], [0], [0], [1], [0, 0, 1, 1], [], []>} : vector<10x128xbf16>, vector<128x128xbf16>, vector<10x128xf32> -> vector<10x128xf32>
    %22 = arith.addf %17, %21 : vector<10x128xf32>
    %23 = vector.extract_strided_slice %1 {offsets = [4, 0], sizes = [10, 128], strides = [1, 1]} : vector<14x128xbf16> to vector<10x128xbf16>
    %c0_21 = arith.constant 0 : index
    %c4 = arith.constant 4 : index
    %c0_22 = arith.constant 0 : index
    %c0_23 = arith.constant 0 : index
    %24 = vector.load %arg3[%c0_21, %c4, %c0_22, %c0_23] : memref<2x5x128x128xbf16, #tpu.memory_space<vmem>>, vector<1x1x128x128xbf16>
    %25 = vector.shape_cast %24 : vector<1x1x128x128xbf16> to vector<128x128xbf16>
    %cst_24 = arith.constant dense<0.000000e+00> : vector<10x128xf32>
    %26 = tpu.matmul %23, %25, %cst_24 {dimension_numbers = #tpu.dot_dimension_numbers<[1], [0], [0], [1], [0, 0, 1, 1], [], []>} : vector<10x128xbf16>, vector<128x128xbf16>, vector<10x128xf32> -> vector<10x128xf32>
    %27 = arith.addf %22, %26 : vector<10x128xf32>
    %c0_25 = arith.constant 0 : index
    %c0_26 = arith.constant 0 : index
    %c0_27 = arith.constant 0 : index
    %28 = vector.load %arg4[%c0_25, %c0_26, %c0_27] : memref<2x1x128xf32, #tpu.memory_space<vmem>>, vector<1x1x128xf32>
    %29 = vector.shape_cast %28 : vector<1x1x128xf32> to vector<1x128xf32>
    %30 = vector.broadcast %29 : vector<1x128xf32> to vector<10x128xf32>
    %31 = arith.addf %27, %30 : vector<10x128xf32>
    %cst_28 = arith.constant 0.000000e+00 : f32
    %32 = vector.broadcast %cst_28 : f32 to vector<10x128xf32>
    %33 = arith.cmpf ogt, %31, %32 : vector<10x128xf32>
    %cst_29 = arith.constant 0.00999999977 : f32
    %34 = vector.broadcast %cst_29 : f32 to vector<10x128xf32>
    %35 = arith.mulf %34, %31 : vector<10x128xf32>
    %36 = arith.select %33, %31, %35 : vector<10x128xi1>, vector<10x128xf32>
    %37 = arith.truncf %36 : vector<10x128xf32> to vector<10x128xbf16>
    %38 = vector.extract_strided_slice %37 {offsets = [0, 0], sizes = [8, 128], strides = [1, 1]} : vector<10x128xbf16> to vector<8x128xbf16>
    %c0_30 = arith.constant 0 : index
    %c0_31 = arith.constant 0 : index
    %c0_32 = arith.constant 0 : index
    %c0_33 = arith.constant 0 : index
    %39 = vector.load %arg5[%c0_30, %c0_31, %c0_32, %c0_33] : memref<2x3x128x128xbf16, #tpu.memory_space<vmem>>, vector<1x1x128x128xbf16>
    %40 = vector.shape_cast %39 : vector<1x1x128x128xbf16> to vector<128x128xbf16>
    %cst_34 = arith.constant dense<0.000000e+00> : vector<8x128xf32>
    %41 = tpu.matmul %38, %40, %cst_34 {dimension_numbers = #tpu.dot_dimension_numbers<[1], [0], [0], [1], [0, 0, 1, 1], [], []>} : vector<8x128xbf16>, vector<128x128xbf16>, vector<8x128xf32> -> vector<8x128xf32>
    %42 = vector.extract_strided_slice %37 {offsets = [1, 0], sizes = [8, 128], strides = [1, 1]} : vector<10x128xbf16> to vector<8x128xbf16>
    %c0_35 = arith.constant 0 : index
    %c1_36 = arith.constant 1 : index
    %c0_37 = arith.constant 0 : index
    %c0_38 = arith.constant 0 : index
    %43 = vector.load %arg5[%c0_35, %c1_36, %c0_37, %c0_38] : memref<2x3x128x128xbf16, #tpu.memory_space<vmem>>, vector<1x1x128x128xbf16>
    %44 = vector.shape_cast %43 : vector<1x1x128x128xbf16> to vector<128x128xbf16>
    %cst_39 = arith.constant dense<0.000000e+00> : vector<8x128xf32>
    %45 = tpu.matmul %42, %44, %cst_39 {dimension_numbers = #tpu.dot_dimension_numbers<[1], [0], [0], [1], [0, 0, 1, 1], [], []>} : vector<8x128xbf16>, vector<128x128xbf16>, vector<8x128xf32> -> vector<8x128xf32>
    %46 = arith.addf %41, %45 : vector<8x128xf32>
    %47 = vector.extract_strided_slice %37 {offsets = [2, 0], sizes = [8, 128], strides = [1, 1]} : vector<10x128xbf16> to vector<8x128xbf16>
    %c0_40 = arith.constant 0 : index
    %c2_41 = arith.constant 2 : index
    %c0_42 = arith.constant 0 : index
    %c0_43 = arith.constant 0 : index
    %48 = vector.load %arg5[%c0_40, %c2_41, %c0_42, %c0_43] : memref<2x3x128x128xbf16, #tpu.memory_space<vmem>>, vector<1x1x128x128xbf16>
    %49 = vector.shape_cast %48 : vector<1x1x128x128xbf16> to vector<128x128xbf16>
    %cst_44 = arith.constant dense<0.000000e+00> : vector<8x128xf32>
    %50 = tpu.matmul %47, %49, %cst_44 {dimension_numbers = #tpu.dot_dimension_numbers<[1], [0], [0], [1], [0, 0, 1, 1], [], []>} : vector<8x128xbf16>, vector<128x128xbf16>, vector<8x128xf32> -> vector<8x128xf32>
    %51 = arith.addf %46, %50 : vector<8x128xf32>
    %c0_45 = arith.constant 0 : index
    %c0_46 = arith.constant 0 : index
    %c0_47 = arith.constant 0 : index
    %52 = vector.load %arg6[%c0_45, %c0_46, %c0_47] : memref<2x1x128xf32, #tpu.memory_space<vmem>>, vector<1x1x128xf32>
    %53 = vector.shape_cast %52 : vector<1x1x128xf32> to vector<1x128xf32>
    %54 = vector.broadcast %53 : vector<1x128xf32> to vector<8x128xf32>
    %55 = arith.addf %51, %54 : vector<8x128xf32>
    %56 = math.tanh %55 : vector<8x128xf32>
    %57 = math.exp %56 : vector<8x128xf32>
    %c64_i32 = arith.constant 64 : i32
    %58 = tpu.dynamic_rotate %3 by %c64_i32 dim 1 : vector<8x128xf32>, i32 -> vector<8x128xf32>
    %59 = arith.mulf %58, %57 : vector<8x128xf32>
    %60 = arith.truncf %59 : vector<8x128xf32> to vector<8x128xbf16>
    %61 = vector.extract_strided_slice %60 {offsets = [0, 0], sizes = [1, 128], strides = [1, 1]} : vector<8x128xbf16> to vector<1x128xbf16>
    %62 = vector.shape_cast %61 : vector<1x128xbf16> to vector<1x128xbf16>
    %63 = vector.broadcast %62 : vector<1x128xbf16> to vector<3x128xbf16>
    %64 = vector.extract_strided_slice %60 {offsets = [7, 0], sizes = [1, 128], strides = [1, 1]} : vector<8x128xbf16> to vector<1x128xbf16>
    %65 = vector.shape_cast %64 : vector<1x128xbf16> to vector<1x128xbf16>
    %66 = vector.broadcast %65 : vector<1x128xbf16> to vector<3x128xbf16>
    %67 = tpu.concatenate %63, %60, %66 in 0 : vector<3x128xbf16>, vector<8x128xbf16>, vector<3x128xbf16> -> vector<14x128xbf16>
    %68 = vector.extract_strided_slice %67 {offsets = [0, 0], sizes = [10, 128], strides = [1, 1]} : vector<14x128xbf16> to vector<10x128xbf16>
    %c1_48 = arith.constant 1 : index
    %c0_49 = arith.constant 0 : index
    %c0_50 = arith.constant 0 : index
    %c0_51 = arith.constant 0 : index
    %69 = vector.load %arg3[%c1_48, %c0_49, %c0_50, %c0_51] : memref<2x5x128x128xbf16, #tpu.memory_space<vmem>>, vector<1x1x128x128xbf16>
    %70 = vector.shape_cast %69 : vector<1x1x128x128xbf16> to vector<128x128xbf16>
    %cst_52 = arith.constant dense<0.000000e+00> : vector<10x128xf32>
    %71 = tpu.matmul %68, %70, %cst_52 {dimension_numbers = #tpu.dot_dimension_numbers<[1], [0], [0], [1], [0, 0, 1, 1], [], []>} : vector<10x128xbf16>, vector<128x128xbf16>, vector<10x128xf32> -> vector<10x128xf32>
    %72 = vector.extract_strided_slice %67 {offsets = [1, 0], sizes = [10, 128], strides = [1, 1]} : vector<14x128xbf16> to vector<10x128xbf16>
    %c1_53 = arith.constant 1 : index
    %c1_54 = arith.constant 1 : index
    %c0_55 = arith.constant 0 : index
    %c0_56 = arith.constant 0 : index
    %73 = vector.load %arg3[%c1_53, %c1_54, %c0_55, %c0_56] : memref<2x5x128x128xbf16, #tpu.memory_space<vmem>>, vector<1x1x128x128xbf16>
    %74 = vector.shape_cast %73 : vector<1x1x128x128xbf16> to vector<128x128xbf16>
    %cst_57 = arith.constant dense<0.000000e+00> : vector<10x128xf32>
    %75 = tpu.matmul %72, %74, %cst_57 {dimension_numbers = #tpu.dot_dimension_numbers<[1], [0], [0], [1], [0, 0, 1, 1], [], []>} : vector<10x128xbf16>, vector<128x128xbf16>, vector<10x128xf32> -> vector<10x128xf32>
    %76 = arith.addf %71, %75 : vector<10x128xf32>
    %77 = vector.extract_strided_slice %67 {offsets = [2, 0], sizes = [10, 128], strides = [1, 1]} : vector<14x128xbf16> to vector<10x128xbf16>
    %c1_58 = arith.constant 1 : index
    %c2_59 = arith.constant 2 : index
    %c0_60 = arith.constant 0 : index
    %c0_61 = arith.constant 0 : index
    %78 = vector.load %arg3[%c1_58, %c2_59, %c0_60, %c0_61] : memref<2x5x128x128xbf16, #tpu.memory_space<vmem>>, vector<1x1x128x128xbf16>
    %79 = vector.shape_cast %78 : vector<1x1x128x128xbf16> to vector<128x128xbf16>
    %cst_62 = arith.constant dense<0.000000e+00> : vector<10x128xf32>
    %80 = tpu.matmul %77, %79, %cst_62 {dimension_numbers = #tpu.dot_dimension_numbers<[1], [0], [0], [1], [0, 0, 1, 1], [], []>} : vector<10x128xbf16>, vector<128x128xbf16>, vector<10x128xf32> -> vector<10x128xf32>
    %81 = arith.addf %76, %80 : vector<10x128xf32>
    %82 = vector.extract_strided_slice %67 {offsets = [3, 0], sizes = [10, 128], strides = [1, 1]} : vector<14x128xbf16> to vector<10x128xbf16>
    %c1_63 = arith.constant 1 : index
    %c3_64 = arith.constant 3 : index
    %c0_65 = arith.constant 0 : index
    %c0_66 = arith.constant 0 : index
    %83 = vector.load %arg3[%c1_63, %c3_64, %c0_65, %c0_66] : memref<2x5x128x128xbf16, #tpu.memory_space<vmem>>, vector<1x1x128x128xbf16>
    %84 = vector.shape_cast %83 : vector<1x1x128x128xbf16> to vector<128x128xbf16>
    %cst_67 = arith.constant dense<0.000000e+00> : vector<10x128xf32>
    %85 = tpu.matmul %82, %84, %cst_67 {dimension_numbers = #tpu.dot_dimension_numbers<[1], [0], [0], [1], [0, 0, 1, 1], [], []>} : vector<10x128xbf16>, vector<128x128xbf16>, vector<10x128xf32> -> vector<10x128xf32>
    %86 = arith.addf %81, %85 : vector<10x128xf32>
    %87 = vector.extract_strided_slice %67 {offsets = [4, 0], sizes = [10, 128], strides = [1, 1]} : vector<14x128xbf16> to vector<10x128xbf16>
    %c1_68 = arith.constant 1 : index
    %c4_69 = arith.constant 4 : index
    %c0_70 = arith.constant 0 : index
    %c0_71 = arith.constant 0 : index
    %88 = vector.load %arg3[%c1_68, %c4_69, %c0_70, %c0_71] : memref<2x5x128x128xbf16, #tpu.memory_space<vmem>>, vector<1x1x128x128xbf16>
    %89 = vector.shape_cast %88 : vector<1x1x128x128xbf16> to vector<128x128xbf16>
    %cst_72 = arith.constant dense<0.000000e+00> : vector<10x128xf32>
    %90 = tpu.matmul %87, %89, %cst_72 {dimension_numbers = #tpu.dot_dimension_numbers<[1], [0], [0], [1], [0, 0, 1, 1], [], []>} : vector<10x128xbf16>, vector<128x128xbf16>, vector<10x128xf32> -> vector<10x128xf32>
    %91 = arith.addf %86, %90 : vector<10x128xf32>
    %c1_73 = arith.constant 1 : index
    %c0_74 = arith.constant 0 : index
    %c0_75 = arith.constant 0 : index
    %92 = vector.load %arg4[%c1_73, %c0_74, %c0_75] : memref<2x1x128xf32, #tpu.memory_space<vmem>>, vector<1x1x128xf32>
    %93 = vector.shape_cast %92 : vector<1x1x128xf32> to vector<1x128xf32>
    %94 = vector.broadcast %93 : vector<1x128xf32> to vector<10x128xf32>
    %95 = arith.addf %91, %94 : vector<10x128xf32>
    %cst_76 = arith.constant 0.000000e+00 : f32
    %96 = vector.broadcast %cst_76 : f32 to vector<10x128xf32>
    %97 = arith.cmpf ogt, %95, %96 : vector<10x128xf32>
    %cst_77 = arith.constant 0.00999999977 : f32
    %98 = vector.broadcast %cst_77 : f32 to vector<10x128xf32>
    %99 = arith.mulf %98, %95 : vector<10x128xf32>
    %100 = arith.select %97, %95, %99 : vector<10x128xi1>, vector<10x128xf32>
    %101 = arith.truncf %100 : vector<10x128xf32> to vector<10x128xbf16>
    %102 = vector.extract_strided_slice %101 {offsets = [0, 0], sizes = [8, 128], strides = [1, 1]} : vector<10x128xbf16> to vector<8x128xbf16>
    %c1_78 = arith.constant 1 : index
    %c0_79 = arith.constant 0 : index
    %c0_80 = arith.constant 0 : index
    %c0_81 = arith.constant 0 : index
    %103 = vector.load %arg5[%c1_78, %c0_79, %c0_80, %c0_81] : memref<2x3x128x128xbf16, #tpu.memory_space<vmem>>, vector<1x1x128x128xbf16>
    %104 = vector.shape_cast %103 : vector<1x1x128x128xbf16> to vector<128x128xbf16>
    %cst_82 = arith.constant dense<0.000000e+00> : vector<8x128xf32>
    %105 = tpu.matmul %102, %104, %cst_82 {dimension_numbers = #tpu.dot_dimension_numbers<[1], [0], [0], [1], [0, 0, 1, 1], [], []>} : vector<8x128xbf16>, vector<128x128xbf16>, vector<8x128xf32> -> vector<8x128xf32>
    %106 = vector.extract_strided_slice %101 {offsets = [1, 0], sizes = [8, 128], strides = [1, 1]} : vector<10x128xbf16> to vector<8x128xbf16>
    %c1_83 = arith.constant 1 : index
    %c1_84 = arith.constant 1 : index
    %c0_85 = arith.constant 0 : index
    %c0_86 = arith.constant 0 : index
    %107 = vector.load %arg5[%c1_83, %c1_84, %c0_85, %c0_86] : memref<2x3x128x128xbf16, #tpu.memory_space<vmem>>, vector<1x1x128x128xbf16>
    %108 = vector.shape_cast %107 : vector<1x1x128x128xbf16> to vector<128x128xbf16>
    %cst_87 = arith.constant dense<0.000000e+00> : vector<8x128xf32>
    %109 = tpu.matmul %106, %108, %cst_87 {dimension_numbers = #tpu.dot_dimension_numbers<[1], [0], [0], [1], [0, 0, 1, 1], [], []>} : vector<8x128xbf16>, vector<128x128xbf16>, vector<8x128xf32> -> vector<8x128xf32>
    %110 = arith.addf %105, %109 : vector<8x128xf32>
    %111 = vector.extract_strided_slice %101 {offsets = [2, 0], sizes = [8, 128], strides = [1, 1]} : vector<10x128xbf16> to vector<8x128xbf16>
    %c1_88 = arith.constant 1 : index
    %c2_89 = arith.constant 2 : index
    %c0_90 = arith.constant 0 : index
    %c0_91 = arith.constant 0 : index
    %112 = vector.load %arg5[%c1_88, %c2_89, %c0_90, %c0_91] : memref<2x3x128x128xbf16, #tpu.memory_space<vmem>>, vector<1x1x128x128xbf16>
    %113 = vector.shape_cast %112 : vector<1x1x128x128xbf16> to vector<128x128xbf16>
    %cst_92 = arith.constant dense<0.000000e+00> : vector<8x128xf32>
    %114 = tpu.matmul %111, %113, %cst_92 {dimension_numbers = #tpu.dot_dimension_numbers<[1], [0], [0], [1], [0, 0, 1, 1], [], []>} : vector<8x128xbf16>, vector<128x128xbf16>, vector<8x128xf32> -> vector<8x128xf32>
    %115 = arith.addf %110, %114 : vector<8x128xf32>
    %c1_93 = arith.constant 1 : index
    %c0_94 = arith.constant 0 : index
    %c0_95 = arith.constant 0 : index
    %116 = vector.load %arg6[%c1_93, %c0_94, %c0_95] : memref<2x1x128xf32, #tpu.memory_space<vmem>>, vector<1x1x128xf32>
    %117 = vector.shape_cast %116 : vector<1x1x128xf32> to vector<1x128xf32>
    %118 = vector.broadcast %117 : vector<1x128xf32> to vector<8x128xf32>
    %119 = arith.addf %115, %118 : vector<8x128xf32>
    %120 = math.tanh %119 : vector<8x128xf32>
    %c64_i32_96 = arith.constant 64 : i32
    %121 = tpu.dynamic_rotate %59 by %c64_i32_96 dim 1 : vector<8x128xf32>, i32 -> vector<8x128xf32>
    %122 = arith.addf %121, %120 : vector<8x128xf32>
    %c0_97 = arith.constant 0 : index
    %c0_98 = arith.constant 0 : index
    %c0_99 = arith.constant 0 : index
    %123 = vector.load %arg7[%c0_97, %c0_98, %c0_99] : memref<1x8x128xf32, #tpu.memory_space<vmem>>, vector<1x8x128xf32>
    %124 = vector.shape_cast %123 : vector<1x8x128xf32> to vector<8x128xf32>
    %125 = vector.shape_cast %122 : vector<8x128xf32> to vector<1x8x128xf32>
    tpu.vector_store %arg7[%c0_97, %c0_98, %c0_99], %125 {strides = array<i32>} : memref<1x8x128xf32, #tpu.memory_space<vmem>>, vector<1x8x128xf32>,
    return
  }
  func.func @transform_0(%arg0: i32) -> (i32, i32, i32) {
    %c0_i32 = arith.constant 0 : i32
    %c0_i32_0 = arith.constant 0 : i32
    %c0_i32_1 = arith.constant 0 : i32
    return %arg0, %c0_i32, %c0_i32_0 : i32, i32, i32
  }
  func.func @transform_1(%arg0: i32) -> (i32, i32, i32) {
    %c0_i32 = arith.constant 0 : i32
    %c0_i32_0 = arith.constant 0 : i32
    %c0_i32_1 = arith.constant 0 : i32
    return %arg0, %c0_i32, %c0_i32_0 : i32, i32, i32
  }
  func.func @transform_2(%arg0: i32) -> (i32, i32, i32, i32) {
    %c0_i32 = arith.constant 0 : i32
    %c0_i32_0 = arith.constant 0 : i32
    %c0_i32_1 = arith.constant 0 : i32
    %c0_i32_2 = arith.constant 0 : i32
    %c0_i32_3 = arith.constant 0 : i32
    return %c0_i32, %c0_i32_0, %c0_i32_1, %c0_i32_2 : i32, i32, i32, i32
  }
  func.func @transform_3(%arg0: i32) -> (i32, i32, i32) {
    %c0_i32 = arith.constant 0 : i32
    %c0_i32_0 = arith.constant 0 : i32
    %c0_i32_1 = arith.constant 0 : i32
    %c0_i32_2 = arith.constant 0 : i32
    return %c0_i32, %c0_i32_0, %c0_i32_1 : i32, i32, i32
  }
  func.func @transform_4(%arg0: i32) -> (i32, i32, i32, i32) {
    %c0_i32 = arith.constant 0 : i32
    %c0_i32_0 = arith.constant 0 : i32
    %c0_i32_1 = arith.constant 0 : i32
    %c0_i32_2 = arith.constant 0 : i32
    %c0_i32_3 = arith.constant 0 : i32
    return %c0_i32, %c0_i32_0, %c0_i32_1, %c0_i32_2 : i32, i32, i32, i32
  }
  func.func @transform_5(%arg0: i32) -> (i32, i32, i32) {
    %c0_i32 = arith.constant 0 : i32
    %c0_i32_0 = arith.constant 0 : i32
    %c0_i32_1 = arith.constant 0 : i32
    %c0_i32_2 = arith.constant 0 : i32
    return %c0_i32, %c0_i32_0, %c0_i32_1 : i32, i32, i32
  }
  func.func @transform_6(%arg0: i32) -> (i32, i32, i32) {
    %c0_i32 = arith.constant 0 : i32
    %c0_i32_0 = arith.constant 0 : i32
    %c0_i32_1 = arith.constant 0 : i32
    return %arg0, %c0_i32, %c0_i32_0 : i32, i32, i32
  }
}

</mosaic_0001>

<llo_original>
// kernel: interactor_level.1
$region0: #{interactor_level.1}
  #allocation0 [shape = 'u32[]', space=smem, size = 0x4, offset = 0x4, fixed_abs, tag = 'smem constant byte address 0x4 - core index']
  #allocation1 [shape = 'u32[144,128]{1,0:T(1,128)}', space=vmem, size = 0x12000, scoped, tag = 'internal scratch']
  %s0 = inlined_call_operand.vmem [shape: bf16[4,14,128], index: 0, kind: input, shape index: {}]
  %s1 = inlined_call_operand.vmem [shape: f32[4,8,128], index: 1, kind: input, shape index: {}]
  %s2 = inlined_call_operand.vmem [shape: bf16[2,5,128,128], index: 2, kind: input, shape index: {}]
  %s3 = inlined_call_operand.vmem [shape: f32[2,1,128], index: 3, kind: input, shape index: {}]
  %s4 = inlined_call_operand.vmem [shape: bf16[2,3,128,128], index: 4, kind: input, shape index: {}]
  %s5 = inlined_call_operand.vmem [shape: f32[2,1,128], index: 5, kind: input, shape index: {}]
  %s6 = inlined_call_operand.vmem [shape: f32[4,8,128], index: 6, kind: output, shape index: {}]
  %s7 = sld [smem:[#allocation0]]
  $region57: #{interactor_level.1} parent=0
    _
  %s9 = ssub.s32 1, %s7
  %s10 = scalar_select 0, %s9, %s7
  loop: start=0, step=1, limit=6
  $region2: #{interactor_level.1} parent=0 // loop_pre_header
    _
  $region3: #{interactor_level.1} parent=0 // loop_header
    %s12 = sphi 0, %s16
    %p13 = scmp.ge.s32.totalorder %s12, 6
    %s22 = sphi 0, %s24
    %s25 = sphi 0, %s22
    %s26 = sphi 0, %s25
    %s42 = sphi 0, %s26
    %s48 = sphi 0, %s50
    %s51 = sphi 0, %s48
    %s52 = sphi 0, %s51
    %s68 = sphi 0, %s52
    %s72 = sphi 0, %s72
    %s74 = sphi 0, %s72
    %s75 = sphi 0, %s74
    %s89 = sphi 0, %s75
    %s93 = sphi 0, %s93
    %s95 = sphi 0, %s93
    %s96 = sphi 0, %s95
    %s110 = sphi 0, %s96
    %s114 = sphi 0, %s114
    %s116 = sphi 0, %s114
    %s117 = sphi 0, %s116
    %s131 = sphi 0, %s117
    %s135 = sphi 0, %s135
    %s137 = sphi 0, %s135
    %s138 = sphi 0, %s137
    %s152 = sphi 0, %s138
    %s158 = sphi 0, %s160
    %s161 = sphi 0, %s158
    %s162 = sphi 0, %s161
    %s178 = sphi 0, %s162
  $region4: #{interactor_level.1} parent=0 // loop_header_branch
    %15 = sbr.rel (%p13) target = $region8
  $region5: #{interactor_level.1} parent=0 // loop_body
    %s17 = ssub.s32 %s12, 1
    %s18 = ssub.s32 %s12, 2
    %s19 = sadd.s32 %s12, 1
    %s20 = ssub.s32 %s12, %s19
    %p21 = scmp.eq.s32.totalorder %s20, 0
    %s23 = sadd.s32 %s22, 1
    %s24 = scalar_select %p21, %s22, %s23
    %p27 = pneg %p21
    %p28 = scmp.eq.s32.totalorder %s12, 3
    %p29 = por %p27, %p28
    %p30 = scmp.ne.s32.totalorder %s22, %s25
    %p31 = scmp.eq.s32.totalorder %s12, 0
    %p32 = por %p30, %p31
    %p33 = scmp.ne.s32.totalorder %s22, %s25
    %p34 = scmp.eq.s32.totalorder %s17, 3
    %p35 = por %p33, %p34
    %p36 = scmp.ne.s32.totalorder %s25, %s26
    %p37 = scmp.eq.s32.totalorder %s17, 0
    %p38 = por %p36, %p37
    %p39 = scmp.ne.s32.totalorder %s25, %s26
    %p40 = scmp.eq.s32.totalorder %s18, 3
    %p41 = por %p39, %p40
    %p43 = scmp.ne.s32.totalorder %s26, %s42
    %p44 = scmp.eq.s32.totalorder %s18, 0
    %p45 = por %p43, %p44
    %s46 = ssub.s32 %s12, %s19
    %p47 = scmp.eq.s32.totalorder %s46, 0
    %s49 = sadd.s32 %s48, 1
    %s50 = scalar_select %p47, %s48, %s49
    %p53 = pneg %p47
    %p54 = scmp.eq.s32.totalorder %s12, 3
    %p55 = por %p53, %p54
    %p56 = scmp.ne.s32.totalorder %s48, %s51
    %p57 = scmp.eq.s32.totalorder %s12, 0
    %p58 = por %p56, %p57
    %p59 = scmp.ne.s32.totalorder %s48, %s51
    %p60 = scmp.eq.s32.totalorder %s17, 3
    %p61 = por %p59, %p60
    %p62 = scmp.ne.s32.totalorder %s51, %s52
    %p63 = scmp.eq.s32.totalorder %s17, 0
    %p64 = por %p62, %p63
    %p65 = scmp.ne.s32.totalorder %s51, %s52
    %p66 = scmp.eq.s32.totalorder %s18, 3
    %p67 = por %p65, %p66
    %p69 = scmp.ne.s32.totalorder %s52, %s68
    %p70 = scmp.eq.s32.totalorder %s18, 0
    %p71 = por %p69, %p70
    %s73 = sadd.s32 %s72, 1
    %p76 = scmp.eq.s32.totalorder %s12, 3
    %p77 = scmp.ne.s32.totalorder %s72, %s74
    %p78 = scmp.eq.s32.totalorder %s12, 0
    %p79 = por %p77, %p78
    %p80 = scmp.ne.s32.totalorder %s72, %s74
    %p81 = scmp.eq.s32.totalorder %s17, 3
    %p82 = por %p80, %p81
    %p83 = scmp.ne.s32.totalorder %s74, %s75
    %p84 = scmp.eq.s32.totalorder %s17, 0
    %p85 = por %p83, %p84
    %p86 = scmp.ne.s32.totalorder %s74, %s75
    %p87 = scmp.eq.s32.totalorder %s18, 3
    %p88 = por %p86, %p87
    %p90 = scmp.ne.s32.totalorder %s75, %s89
    %p91 = scmp.eq.s32.totalorder %s18, 0
    %p92 = por %p90, %p91
    %s94 = sadd.s32 %s93, 1
    %p97 = scmp.eq.s32.totalorder %s12, 3
    %p98 = scmp.ne.s32.totalorder %s93, %s95
    %p99 = scmp.eq.s32.totalorder %s12, 0
    %p100 = por %p98, %p99
    %p101 = scmp.ne.s32.totalorder %s93, %s95
    %p102 = scmp.eq.s32.totalorder %s17, 3
    %p103 = por %p101, %p102
    %p104 = scmp.ne.s32.totalorder %s95, %s96
    %p105 = scmp.eq.s32.totalorder %s17, 0
    %p106 = por %p104, %p105
    %p107 = scmp.ne.s32.totalorder %s95, %s96
    %p108 = scmp.eq.s32.totalorder %s18, 3
    %p109 = por %p107, %p108
    %p111 = scmp.ne.s32.totalorder %s96, %s110
    %p112 = scmp.eq.s32.totalorder %s18, 0
    %p113 = por %p111, %p112
    %s115 = sadd.s32 %s114, 1
    %p118 = scmp.eq.s32.totalorder %s12, 3
    %p119 = scmp.ne.s32.totalorder %s114, %s116
    %p120 = scmp.eq.s32.totalorder %s12, 0
    %p121 = por %p119, %p120
    %p122 = scmp.ne.s32.totalorder %s114, %s116
    %p123 = scmp.eq.s32.totalorder %s17, 3
    %p124 = por %p122, %p123
    %p125 = scmp.ne.s32.totalorder %s116, %s117
    %p126 = scmp.eq.s32.totalorder %s17, 0
    %p127 = por %p125, %p126
    %p128 = scmp.ne.s32.totalorder %s116, %s117
    %p129 = scmp.eq.s32.totalorder %s18, 3
    %p130 = por %p128, %p129
    %p132 = scmp.ne.s32.totalorder %s117, %s131
    %p133 = scmp.eq.s32.totalorder %s18, 0
    %p134 = por %p132, %p133
    %s136 = sadd.s32 %s135, 1
    %p139 = scmp.eq.s32.totalorder %s12, 3
    %p140 = scmp.ne.s32.totalorder %s135, %s137
    %p141 = scmp.eq.s32.totalorder %s12, 0
    %p142 = por %p140, %p141
    %p143 = scmp.ne.s32.totalorder %s135, %s137
    %p144 = scmp.eq.s32.totalorder %s17, 3
    %p145 = por %p143, %p144
    %p146 = scmp.ne.s32.totalorder %s137, %s138
    %p147 = scmp.eq.s32.totalorder %s17, 0
    %p148 = por %p146, %p147
    %p149 = scmp.ne.s32.totalorder %s137, %s138
    %p150 = scmp.eq.s32.totalorder %s18, 3
    %p151 = por %p149, %p150
    %p153 = scmp.ne.s32.totalorder %s138, %s152
    %p154 = scmp.eq.s32.totalorder %s18, 0
    %p155 = por %p153, %p154
    %s156 = ssub.s32 %s12, %s19
    %p157 = scmp.eq.s32.totalorder %s156, 0
    %s159 = sadd.s32 %s158, 1
    %s160 = scalar_select %p157, %s158, %s159
    %p163 = pneg %p157
    %p164 = scmp.eq.s32.totalorder %s12, 3
    %p165 = por %p163, %p164
    %p166 = scmp.ne.s32.totalorder %s158, %s161
    %p167 = scmp.eq.s32.totalorder %s12, 0
    %p168 = por %p166, %p167
    %p169 = scmp.ne.s32.totalorder %s158, %s161
    %p170 = scmp.eq.s32.totalorder %s17, 3
    %p171 = por %p169, %p170
    %p172 = scmp.ne.s32.totalorder %s161, %s162
    %p173 = scmp.eq.s32.totalorder %s17, 0
    %p174 = por %p172, %p173
    %p175 = scmp.ne.s32.totalorder %s161, %s162
    %p176 = scmp.eq.s32.totalorder %s18, 3
    %p177 = por %p175, %p176
    %p179 = scmp.ne.s32.totalorder %s162, %s178
    %p180 = scmp.eq.s32.totalorder %s18, 0
    %p181 = por %p179, %p180
    %p182 = scmp.le.s32.totalorder 1, %s12
    %p183 = scmp.lt.s32.totalorder %s12, 5
    %p184 = pnand %p182, %p183
    %p185 = pneg %p184
    // Predicated region
    $region9: #{interactor_level.1} parent=5 // pred_check
      _
    $region10: #{interactor_level.1} parent=5 // pred_check_branch
      %187 = sbr.rel (%p184) target = $region12
    $region11: #{interactor_level.1} parent=5 // pred_region
      %s188 = ssub.s32 %s12, 1
      // Predicated region
      $region13: #{interactor_level.1} parent=11 // pred_check
        %p189 = pneg %p85
      $region14: #{interactor_level.1} parent=11 // pred_check_branch
        %191 = sbr.rel (%p189) target = $region16
      $region15: #{interactor_level.1} parent=11 // pred_region
        _
      $region16: #{interactor_level.1} parent=11 // pred_fallthru
        _
      // Predicated region
      $region17: #{interactor_level.1} parent=11 // pred_check
        %p192 = pneg %p106
      $region18: #{interactor_level.1} parent=11 // pred_check_branch
        %194 = sbr.rel (%p192) target = $region20
      $region19: #{interactor_level.1} parent=11 // pred_region
        _
      $region20: #{interactor_level.1} parent=11 // pred_fallthru
        _
      // Predicated region
      $region21: #{interactor_level.1} parent=11 // pred_check
        %p195 = pneg %p127
      $region22: #{interactor_level.1} parent=11 // pred_check_branch
        %197 = sbr.rel (%p195) target = $region24
      $region23: #{interactor_level.1} parent=11 // pred_region
        _
      $region24: #{interactor_level.1} parent=11 // pred_fallthru
        _
      // Predicated region
      $region25: #{interactor_level.1} parent=11 // pred_check
        %p198 = pneg %p148
      $region26: #{interactor_level.1} parent=11 // pred_check_branch
        %200 = sbr.rel (%p198) target = $region28
      $region27: #{interactor_level.1} parent=11 // pred_region
        _
      $region28: #{interactor_level.1} parent=11 // pred_fallthru
        _
    $region12: #{interactor_level.1} parent=5 // pred_fallthru
      _
    %p201 = scmp.lt.s32.totalorder %s12, 4
    // Predicated region
    $region29: #{interactor_level.1} parent=5 // pred_check
      %p202 = pneg %p201
    $region30: #{interactor_level.1} parent=5 // pred_check_branch
      %204 = sbr.rel (%p202) target = $region32
    $region31: #{interactor_level.1} parent=5 // pred_region
      // Predicated region
      $region33: #{interactor_level.1} parent=31 // pred_check
        %p205 = pneg %p32
      $region34: #{interactor_level.1} parent=31 // pred_check_branch
        %207 = sbr.rel (%p205) target = $region36
      $region35: #{interactor_level.1} parent=31 // pred_region
        %p208 = scmp.lt.s32.totalorder %s12, 3
        %s209 = scalar_select %p208, %s12, 3
        %s210 = smul.addr %s209, 2
        %s211 = smul.addr %s210, 4
        %s212 = scalar_lea.vmem %s0, %s211
      $region36: #{interactor_level.1} parent=31 // pred_fallthru
        _
      // Predicated region
      $region37: #{interactor_level.1} parent=31 // pred_check
        %p213 = pneg %p58
      $region38: #{interactor_level.1} parent=31 // pred_check_branch
        %215 = sbr.rel (%p213) target = $region40
      $region39: #{interactor_level.1} parent=31 // pred_region
        %p216 = scmp.lt.s32.totalorder %s12, 3
        %s217 = scalar_select %p216, %s12, 3
        %s218 = smul.addr %s217, 8
        %s219 = scalar_lea.vmem %s1, %s218
      $region40: #{interactor_level.1} parent=31 // pred_fallthru
        _
    $region32: #{interactor_level.1} parent=5 // pred_fallthru
      _
    %p220 = scmp.le.s32.totalorder 1, %s12
    %p221 = scmp.lt.s32.totalorder %s12, 5
    %p222 = pnand %p220, %p221
    %p223 = pneg %p222
    // Predicated region
    $region41: #{interactor_level.1} parent=5 // pred_check
      _
    $region42: #{interactor_level.1} parent=5 // pred_check_branch
      %225 = sbr.rel (%p222) target = $region44
    $region43: #{interactor_level.1} parent=5 // pred_region
      %s226 = ssub.s32 %s12, 1
      %p227 = scmp.lt.s32.totalorder %s17, 3
      %s228 = scalar_select %p227, %s17, 3
      %s229 = smul.addr %s228, 2
      %s230 = smul.addr %s229, 4
      %s231 = scalar_lea.vmem %s0, %s230
      %p232 = pneg %p38
      %p233 = pneg %p35
      %p234 = scmp.lt.s32.totalorder %s17, 3
      %s235 = scalar_select %p234, %s17, 3
      %s236 = smul.addr %s235, 8
      %s237 = scalar_lea.vmem %s1, %s236
      %p238 = pneg %p64
      %p239 = pneg %p61
      %p240 = pneg %p85
      %p241 = pneg %p82
      %p242 = pneg %p106
      %p243 = pneg %p103
      %p244 = pneg %p127
      %p245 = pneg %p124
      %p246 = pneg %p148
      %p247 = pneg %p145
      %p248 = pneg %p174
      %p249 = pneg %p171
      %p250 = scmp.lt.s32.totalorder %s17, 3
      %s251 = scalar_select %p250, %s17, 3
      %s252 = smul.addr %s251, 8
      %s253 = scalar_lea.vmem %s6, %s252
      %p254 = scmp.lt.s32.totalorder %s17, 3
      %s255 = scalar_select %p254, %s17, 3
      %s256 = smul.addr %s255, 2
      %s257 = smul.addr %s256, 4
      %s258 = scalar_lea.vmem %s0, %s257
      %p259 = scmp.lt.s32.totalorder %s17, 3
      %s260 = scalar_select %p259, %s17, 3
      %s261 = smul.addr %s260, 8
      %s262 = scalar_lea.vmem %s1, %s261
      %p263 = scmp.lt.s32.totalorder %s17, 3
      %s264 = scalar_select %p263, %s17, 3
      %s265 = smul.addr %s264, 8
      %s266 = scalar_lea.vmem %s6, %s265
      %v268 = vld [vmem:[%s258] sm:$0xf]
      %v269 = vld [vmem:[%s258 + $0x4] sm:$0x7]
      %v270 = vld [vmem:[%s262] sm:$0xff]
      %v271 = vld [vmem:[%s2] sm:$0xf]
      %v272 = vld [vmem:[%s2 + $0x4] sm:$0xf]
      %v273 = vld [vmem:[%s2 + $0x8] sm:$0xf]
      %v274 = vld [vmem:[%s2 + $0xc] sm:$0xf]
      %v275 = vld [vmem:[%s2 + $0x10] sm:$0xf]
      %v276 = vld [vmem:[%s2 + $0x14] sm:$0xf]
      %v277 = vld [vmem:[%s2 + $0x18] sm:$0xf]
      %v278 = vld [vmem:[%s2 + $0x1c] sm:$0xf]
      %v279 = vld [vmem:[%s2 + $0x20] sm:$0xf]
      %v280 = vld [vmem:[%s2 + $0x24] sm:$0xf]
      %v281 = vld [vmem:[%s2 + $0x28] sm:$0xf]
      %v282 = vld [vmem:[%s2 + $0x2c] sm:$0xf]
      %v283 = vld [vmem:[%s2 + $0x30] sm:$0xf]
      %v284 = vld [vmem:[%s2 + $0x34] sm:$0xf]
      %v285 = vld [vmem:[%s2 + $0x38] sm:$0xf]
      %v286 = vld [vmem:[%s2 + $0x3c] sm:$0xf]
      %s287 = scalar_lea.vmem %s2, 64
      %v288 = vld [vmem:[%s287] sm:$0xf]
      %v289 = vld [vmem:[%s287 + $0x4] sm:$0xf]
      %v290 = vld [vmem:[%s287 + $0x8] sm:$0xf]
      %v291 = vld [vmem:[%s287 + $0xc] sm:$0xf]
      %v292 = vld [vmem:[%s287 + $0x10] sm:$0xf]
      %v293 = vld [vmem:[%s287 + $0x14] sm:$0xf]
      %v294 = vld [vmem:[%s287 + $0x18] sm:$0xf]
      %v295 = vld [vmem:[%s287 + $0x1c] sm:$0xf]
      %v296 = vld [vmem:[%s287 + $0x20] sm:$0xf]
      %v297 = vld [vmem:[%s287 + $0x24] sm:$0xf]
      %v298 = vld [vmem:[%s287 + $0x28] sm:$0xf]
      %v299 = vld [vmem:[%s287 + $0x2c] sm:$0xf]
      %v300 = vld [vmem:[%s287 + $0x30] sm:$0xf]
      %v301 = vld [vmem:[%s287 + $0x34] sm:$0xf]
      %v302 = vld [vmem:[%s287 + $0x38] sm:$0xf]
      %v303 = vld [vmem:[%s287 + $0x3c] sm:$0xf]
      %v306 = vunpack.c.l.b16 %v268
      %v307 = vunpack.c.l.b16 %v269
      %v308 = vpack.c.b16 %v307, %v306
      %v310 = vshrl.u32 %v308, 16
      %v312 = vshll.u32 %v308, 16
      %v314 = vrot.slane %v312, 1
      %v315 = vor.u32 %v310, %v314
      %v333 = vunpack.c.l.b16 %v288
      %v334 = vunpack.c.l.b16 %v289
      %v335 = vunpack.c.l.b16 %v290
      %v336 = vunpack.c.l.b16 %v291
      %v337 = vunpack.c.l.b16 %v292
      %v338 = vunpack.c.l.b16 %v293
      %v339 = vunpack.c.l.b16 %v294
      %v340 = vunpack.c.l.b16 %v295
      %v341 = vunpack.c.l.b16 %v296
      %v342 = vunpack.c.l.b16 %v297
      %v343 = vunpack.c.l.b16 %v298
      %v344 = vunpack.c.l.b16 %v299
      %v345 = vunpack.c.l.b16 %v300
      %v346 = vunpack.c.l.b16 %v301
      %v347 = vunpack.c.l.b16 %v302
      %v348 = vunpack.c.l.b16 %v303
      %v349 = vpack.c.b16 %v334, %v333
      %v350 = vpack.c.b16 %v336, %v335
      %v351 = vpack.c.b16 %v338, %v337
      %v352 = vpack.c.b16 %v340, %v339
      %v353 = vpack.c.b16 %v342, %v341
      %v354 = vpack.c.b16 %v344, %v343
      %v355 = vpack.c.b16 %v346, %v345
      %v356 = vpack.c.b16 %v348, %v347
      %365 = vmatprep.subr.bf16.mxu0 0
      %366 = vmatpush1.bf16.msra.mxu0 %v349
      %367 = vmatprep.subr.bf16.mxu0 0
      %368 = vmatpush1.bf16.msra.mxu0 %v350
      %369 = vmatprep.subr.bf16.mxu0 0
      %370 = vmatpush1.bf16.msra.mxu0 %v351
      %371 = vmatprep.subr.bf16.mxu0 0
      %372 = vmatpush1.bf16.msra.mxu0 %v352
      %373 = vmatprep.subr.bf16.mxu0 0
      %374 = vmatpush1.bf16.msra.mxu0 %v353
      %375 = vmatprep.subr.bf16.mxu0 0
      %376 = vmatpush1.bf16.msra.mxu0 %v354
      %377 = vmatprep.subr.bf16.mxu0 0
      %378 = vmatpush1.bf16.msra.mxu0 %v355
      %379 = vmatprep.subr.bf16.mxu0 0
      %380 = vmatpush1.bf16.msra.mxu0 %v356
      %381 = vmatprep.subr.bf16.mxu0 0
      %382 = vmatpush1.bf16.msra.mxu0 0
      %383 = vmatprep.subr.bf16.mxu0 0
      %384 = vmatpush1.bf16.msra.mxu0 0
      %385 = vmatprep.subr.bf16.mxu0 0
      %386 = vmatpush1.bf16.msra.mxu0 0
      %387 = vmatprep.subr.bf16.mxu0 0
      %388 = vmatpush1.bf16.msra.mxu0 0
      %389 = vmatprep.subr.bf16.mxu0 0
      %390 = vmatpush1.bf16.msra.mxu0 0
      %391 = vmatprep.subr.bf16.mxu0 0
      %392 = vmatpush1.bf16.msra.mxu0 0
      %393 = vmatprep.subr.bf16.mxu0 0
      %394 = vmatpush1.bf16.msra.mxu0 0
      %395 = vmatprep.subr.bf16.mxu0 0
      %396 = vmatpush1.bf16.msra.mxu0 0
      %397 = vmatprep.mubr.bf16.mxu0 0
      %398 = vmatmul.mubr.bf16.gmra.mrb[0].mxu0 %v315
      %v399 = vpop.f32.mrb[0].mxu0
      %v400 = vadd.f32 0.0, %v399
      %v401 = vpop.f32.mrb[0].mxu0
      %v402 = vpop.f32.mrb[0].mxu0
      %v403 = vadd.f32 0.0, %v402
      %v404 = vpop.f32.mrb[0].mxu0
      %405 = vdwg.mxu0
      %v423 = vunpack.c.l.b16 %v271
      %v424 = vunpack.c.l.b16 %v272
      %v425 = vunpack.c.l.b16 %v273
      %v426 = vunpack.c.l.b16 %v274
      %v427 = vunpack.c.l.b16 %v275
      %v428 = vunpack.c.l.b16 %v276
      %v429 = vunpack.c.l.b16 %v277
      %v430 = vunpack.c.l.b16 %v278
      %v431 = vunpack.c.l.b16 %v279
      %v432 = vunpack.c.l.b16 %v280
      %v433 = vunpack.c.l.b16 %v281
      %v434 = vunpack.c.l.b16 %v282
      %v435 = vunpack.c.l.b16 %v283
      %v436 = vunpack.c.l.b16 %v284
      %v437 = vunpack.c.l.b16 %v285
      %v438 = vunpack.c.l.b16 %v286
      %v439 = vpack.c.b16 %v424, %v423
      %v440 = vpack.c.b16 %v426, %v425
      %v441 = vpack.c.b16 %v428, %v427
      %v442 = vpack.c.b16 %v430, %v429
      %v443 = vpack.c.b16 %v432, %v431
      %v444 = vpack.c.b16 %v434, %v433
      %v445 = vpack.c.b16 %v436, %v435
      %v446 = vpack.c.b16 %v438, %v437
      %455 = vmatprep.subr.bf16.mxu0 0
      %456 = vmatpush1.bf16.msra.mxu0 %v439
      %457 = vmatprep.subr.bf16.mxu0 0
      %458 = vmatpush1.bf16.msra.mxu0 %v440
      %459 = vmatprep.subr.bf16.mxu0 0
      %460 = vmatpush1.bf16.msra.mxu0 %v441
      %461 = vmatprep.subr.bf16.mxu0 0
      %462 = vmatpush1.bf16.msra.mxu0 %v442
      %463 = vmatprep.subr.bf16.mxu0 0
      %464 = vmatpush1.bf16.msra.mxu0 %v443
      %465 = vmatprep.subr.bf16.mxu0 0
      %466 = vmatpush1.bf16.msra.mxu0 %v444
      %467 = vmatprep.subr.bf16.mxu0 0
      %468 = vmatpush1.bf16.msra.mxu0 %v445
      %469 = vmatprep.subr.bf16.mxu0 0
      %470 = vmatpush1.bf16.msra.mxu0 %v446
      %471 = vmatprep.subr.bf16.mxu0 0
      %472 = vmatpush1.bf16.msra.mxu0 0
      %473 = vmatprep.subr.bf16.mxu0 0
      %474 = vmatpush1.bf16.msra.mxu0 0
      %475 = vmatprep.subr.bf16.mxu0 0
      %476 = vmatpush1.bf16.msra.mxu0 0
      %477 = vmatprep.subr.bf16.mxu0 0
      %478 = vmatpush1.bf16.msra.mxu0 0
      %479 = vmatprep.subr.bf16.mxu0 0
      %480 = vmatpush1.bf16.msra.mxu0 0
      %481 = vmatprep.subr.bf16.mxu0 0
      %482 = vmatpush1.bf16.msra.mxu0 0
      %483 = vmatprep.subr.bf16.mxu0 0
      %484 = vmatpush1.bf16.msra.mxu0 0
      %485 = vmatprep.subr.bf16.mxu0 0
      %486 = vmatpush1.bf16.msra.mxu0 0
      %487 = vmatprep.mubr.bf16.mxu0 0
      %488 = vmatmul.mubr.bf16.gmra.mrb[0].mxu0 %v308
      %v489 = vpop.f32.mrb[0].mxu0
      %v490 = vadd.f32 %v400, %v489
      %v491 = vpop.f32.mrb[0].mxu0
      %v492 = vpop.f32.mrb[0].mxu0
      %v493 = vadd.f32 %v403, %v492
      %v494 = vpop.f32.mrb[0].mxu0
      %495 = vdwg.mxu0
      %s496 = scalar_lea.vmem %s2, 128
      %v497 = vld [vmem:[%s496] sm:$0xf]
      %v498 = vld [vmem:[%s496 + $0x4] sm:$0xf]
      %v499 = vld [vmem:[%s496 + $0x8] sm:$0xf]
      %v500 = vld [vmem:[%s496 + $0xc] sm:$0xf]
      %v501 = vld [vmem:[%s496 + $0x10] sm:$0xf]
      %v502 = vld [vmem:[%s496 + $0x14] sm:$0xf]
      %v503 = vld [vmem:[%s496 + $0x18] sm:$0xf]
      %v504 = vld [vmem:[%s496 + $0x1c] sm:$0xf]
      %v505 = vld [vmem:[%s496 + $0x20] sm:$0xf]
      %v506 = vld [vmem:[%s496 + $0x24] sm:$0xf]
      %v507 = vld [vmem:[%s496 + $0x28] sm:$0xf]
      %v508 = vld [vmem:[%s496 + $0x2c] sm:$0xf]
      %v509 = vld [vmem:[%s496 + $0x30] sm:$0xf]
      %v510 = vld [vmem:[%s496 + $0x34] sm:$0xf]
      %v511 = vld [vmem:[%s496 + $0x38] sm:$0xf]
      %v512 = vld [vmem:[%s496 + $0x3c] sm:$0xf]
      %v513 = vrot.slane %v308, 1
      %v531 = vunpack.c.l.b16 %v497
      %v532 = vunpack.c.l.b16 %v498
      %v533 = vunpack.c.l.b16 %v499
      %v534 = vunpack.c.l.b16 %v500
      %v535 = vunpack.c.l.b16 %v501
      %v536 = vunpack.c.l.b16 %v502
      %v537 = vunpack.c.l.b16 %v503
      %v538 = vunpack.c.l.b16 %v504
      %v539 = vunpack.c.l.b16 %v505
      %v540 = vunpack.c.l.b16 %v506
      %v541 = vunpack.c.l.b16 %v507
      %v542 = vunpack.c.l.b16 %v508
      %v543 = vunpack.c.l.b16 %v509
      %v544 = vunpack.c.l.b16 %v510
      %v545 = vunpack.c.l.b16 %v511
      %v546 = vunpack.c.l.b16 %v512
      %v547 = vpack.c.b16 %v532, %v531
      %v548 = vpack.c.b16 %v534, %v533
      %v549 = vpack.c.b16 %v536, %v535
      %v550 = vpack.c.b16 %v538, %v537
      %v551 = vpack.c.b16 %v540, %v539
      %v552 = vpack.c.b16 %v542, %v541
      %v553 = vpack.c.b16 %v544, %v543
      %v554 = vpack.c.b16 %v546, %v545
      %563 = vmatprep.subr.bf16.mxu0 0
      %564 = vmatpush1.bf16.msra.mxu0 %v547
      %565 = vmatprep.subr.bf16.mxu0 0
      %566 = vmatpush1.bf16.msra.mxu0 %v548
      %567 = vmatprep.subr.bf16.mxu0 0
      %568 = vmatpush1.bf16.msra.mxu0 %v549
      %569 = vmatprep.subr.bf16.mxu0 0
      %570 = vmatpush1.bf16.msra.mxu0 %v550
      %571 = vmatprep.subr.bf16.mxu0 0
      %572 = vmatpush1.bf16.msra.mxu0 %v551
      %573 = vmatprep.subr.bf16.mxu0 0
      %574 = vmatpush1.bf16.msra.mxu0 %v552
      %575 = vmatprep.subr.bf16.mxu0 0
      %576 = vmatpush1.bf16.msra.mxu0 %v553
      %577 = vmatprep.subr.bf16.mxu0 0
      %578 = vmatpush1.bf16.msra.mxu0 %v554
      %579 = vmatprep.subr.bf16.mxu0 0
      %580 = vmatpush1.bf16.msra.mxu0 0
      %581 = vmatprep.subr.bf16.mxu0 0
      %582 = vmatpush1.bf16.msra.mxu0 0
      %583 = vmatprep.subr.bf16.mxu0 0
      %584 = vmatpush1.bf16.msra.mxu0 0
      %585 = vmatprep.subr.bf16.mxu0 0
      %586 = vmatpush1.bf16.msra.mxu0 0
      %587 = vmatprep.subr.bf16.mxu0 0
      %588 = vmatpush1.bf16.msra.mxu0 0
      %589 = vmatprep.subr.bf16.mxu0 0
      %590 = vmatpush1.bf16.msra.mxu0 0
      %591 = vmatprep.subr.bf16.mxu0 0
      %592 = vmatpush1.bf16.msra.mxu0 0
      %593 = vmatprep.subr.bf16.mxu0 0
      %594 = vmatpush1.bf16.msra.mxu0 0
      %595 = vmatprep.mubr.bf16.mxu0 0
      %596 = vmatmul.mubr.bf16.gmra.mrb[0].mxu0 %v513
      %v597 = vpop.f32.mrb[0].mxu0
      %v598 = vadd.f32 0.0, %v597
      %v599 = vpop.f32.mrb[0].mxu0
      %v600 = vpop.f32.mrb[0].mxu0
      %v601 = vadd.f32 0.0, %v600
      %v602 = vpop.f32.mrb[0].mxu0
      %603 = vdwg.mxu0
      %v604 = vadd.f32 %v490, %v598
      %v605 = vadd.f32 %v493, %v601
      %s606 = scalar_lea.vmem %s2, 192
      %v607 = vld [vmem:[%s606] sm:$0xf]
      %v608 = vld [vmem:[%s606 + $0x4] sm:$0xf]
      %v609 = vld [vmem:[%s606 + $0x8] sm:$0xf]
      %v610 = vld [vmem:[%s606 + $0xc] sm:$0xf]
      %v611 = vld [vmem:[%s606 + $0x10] sm:$0xf]
      %v612 = vld [vmem:[%s606 + $0x14] sm:$0xf]
      %v613 = vld [vmem:[%s606 + $0x18] sm:$0xf]
      %v614 = vld [vmem:[%s606 + $0x1c] sm:$0xf]
      %v615 = vld [vmem:[%s606 + $0x20] sm:$0xf]
      %v616 = vld [vmem:[%s606 + $0x24] sm:$0xf]
      %v617 = vld [vmem:[%s606 + $0x28] sm:$0xf]
      %v618 = vld [vmem:[%s606 + $0x2c] sm:$0xf]
      %v619 = vld [vmem:[%s606 + $0x30] sm:$0xf]
      %v620 = vld [vmem:[%s606 + $0x34] sm:$0xf]
      %v621 = vld [vmem:[%s606 + $0x38] sm:$0xf]
      %v622 = vld [vmem:[%s606 + $0x3c] sm:$0xf]
      %v623 = vrot.slane %v310, 1
      %v624 = vrot.slane %v312, 2
      %v625 = vor.u32 %v623, %v624
      %v643 = vunpack.c.l.b16 %v607
      %v644 = vunpack.c.l.b16 %v608
      %v645 = vunpack.c.l.b16 %v609
      %v646 = vunpack.c.l.b16 %v610
      %v647 = vunpack.c.l.b16 %v611
      %v648 = vunpack.c.l.b16 %v612
      %v649 = vunpack.c.l.b16 %v613
      %v650 = vunpack.c.l.b16 %v614
      %v651 = vunpack.c.l.b16 %v615
      %v652 = vunpack.c.l.b16 %v616
      %v653 = vunpack.c.l.b16 %v617
      %v654 = vunpack.c.l.b16 %v618
      %v655 = vunpack.c.l.b16 %v619
      %v656 = vunpack.c.l.b16 %v620
      %v657 = vunpack.c.l.b16 %v621
      %v658 = vunpack.c.l.b16 %v622
      %v659 = vpack.c.b16 %v644, %v643
      %v660 = vpack.c.b16 %v646, %v645
      %v661 = vpack.c.b16 %v648, %v647
      %v662 = vpack.c.b16 %v650, %v649
      %v663 = vpack.c.b16 %v652, %v651
      %v664 = vpack.c.b16 %v654, %v653
      %v665 = vpack.c.b16 %v656, %v655
      %v666 = vpack.c.b16 %v658, %v657
      %675 = vmatprep.subr.bf16.mxu0 0
      %676 = vmatpush1.bf16.msra.mxu0 %v659
      %677 = vmatprep.subr.bf16.mxu0 0
      %678 = vmatpush1.bf16.msra.mxu0 %v660
      %679 = vmatprep.subr.bf16.mxu0 0
      %680 = vmatpush1.bf16.msra.mxu0 %v661
      %681 = vmatprep.subr.bf16.mxu0 0
      %682 = vmatpush1.bf16.msra.mxu0 %v662
      %683 = vmatprep.subr.bf16.mxu0 0
      %684 = vmatpush1.bf16.msra.mxu0 %v663
      %685 = vmatprep.subr.bf16.mxu0 0
      %686 = vmatpush1.bf16.msra.mxu0 %v664
      %687 = vmatprep.subr.bf16.mxu0 0
      %688 = vmatpush1.bf16.msra.mxu0 %v665
      %689 = vmatprep.subr.bf16.mxu0 0
      %690 = vmatpush1.bf16.msra.mxu0 %v666
      %691 = vmatprep.subr.bf16.mxu0 0
      %692 = vmatpush1.bf16.msra.mxu0 0
      %693 = vmatprep.subr.bf16.mxu0 0
      %694 = vmatpush1.bf16.msra.mxu0 0
      %695 = vmatprep.subr.bf16.mxu0 0
      %696 = vmatpush1.bf16.msra.mxu0 0
      %697 = vmatprep.subr.bf16.mxu0 0
      %698 = vmatpush1.bf16.msra.mxu0 0
      %699 = vmatprep.subr.bf16.mxu0 0
      %700 = vmatpush1.bf16.msra.mxu0 0
      %701 = vmatprep.subr.bf16.mxu0 0
      %702 = vmatpush1.bf16.msra.mxu0 0
      %703 = vmatprep.subr.bf16.mxu0 0
      %704 = vmatpush1.bf16.msra.mxu0 0
      %705 = vmatprep.subr.bf16.mxu0 0
      %706 = vmatpush1.bf16.msra.mxu0 0
      %707 = vmatprep.mubr.bf16.mxu0 0
      %708 = vmatmul.mubr.bf16.gmra.mrb[0].mxu0 %v625
      %v709 = vpop.f32.mrb[0].mxu0
      %v710 = vadd.f32 0.0, %v709
      %v711 = vpop.f32.mrb[0].mxu0
      %v712 = vpop.f32.mrb[0].mxu0
      %v713 = vadd.f32 0.0, %v712
      %v714 = vpop.f32.mrb[0].mxu0
      %715 = vdwg.mxu0
      %v716 = vadd.f32 %v604, %v710
      %v717 = vadd.f32 %v605, %v713
      %s718 = scalar_lea.vmem %s2, 256
      %v719 = vld [vmem:[%s718] sm:$0xf]
      %v720 = vld [vmem:[%s718 + $0x4] sm:$0xf]
      %v721 = vld [vmem:[%s718 + $0x8] sm:$0xf]
      %v722 = vld [vmem:[%s718 + $0xc] sm:$0xf]
      %v723 = vld [vmem:[%s718 + $0x10] sm:$0xf]
      %v724 = vld [vmem:[%s718 + $0x14] sm:$0xf]
      %v725 = vld [vmem:[%s718 + $0x18] sm:$0xf]
      %v726 = vld [vmem:[%s718 + $0x1c] sm:$0xf]
      %v727 = vld [vmem:[%s718 + $0x20] sm:$0xf]
      %v728 = vld [vmem:[%s718 + $0x24] sm:$0xf]
      %v729 = vld [vmem:[%s718 + $0x28] sm:$0xf]
      %v730 = vld [vmem:[%s718 + $0x2c] sm:$0xf]
      %v731 = vld [vmem:[%s718 + $0x30] sm:$0xf]
      %v732 = vld [vmem:[%s718 + $0x34] sm:$0xf]
      %v733 = vld [vmem:[%s718 + $0x38] sm:$0xf]
      %v734 = vld [vmem:[%s718 + $0x3c] sm:$0xf]
      %v735 = vrot.slane %v308, 2
      %v753 = vunpack.c.l.b16 %v719
      %v754 = vunpack.c.l.b16 %v720
      %v755 = vunpack.c.l.b16 %v721
      %v756 = vunpack.c.l.b16 %v722
      %v757 = vunpack.c.l.b16 %v723
      %v758 = vunpack.c.l.b16 %v724
      %v759 = vunpack.c.l.b16 %v725
      %v760 = vunpack.c.l.b16 %v726
      %v761 = vunpack.c.l.b16 %v727
      %v762 = vunpack.c.l.b16 %v728
      %v763 = vunpack.c.l.b16 %v729
      %v764 = vunpack.c.l.b16 %v730
      %v765 = vunpack.c.l.b16 %v731
      %v766 = vunpack.c.l.b16 %v732
      %v767 = vunpack.c.l.b16 %v733
      %v768 = vunpack.c.l.b16 %v734
      %v769 = vpack.c.b16 %v754, %v753
      %v770 = vpack.c.b16 %v756, %v755
      %v771 = vpack.c.b16 %v758, %v757
      %v772 = vpack.c.b16 %v760, %v759
      %v773 = vpack.c.b16 %v762, %v761
      %v774 = vpack.c.b16 %v764, %v763
      %v775 = vpack.c.b16 %v766, %v765
      %v776 = vpack.c.b16 %v768, %v767
      %785 = vmatprep.subr.bf16.mxu0 0
      %786 = vmatpush1.bf16.msra.mxu0 %v769
      %787 = vmatprep.subr.bf16.mxu0 0
      %788 = vmatpush1.bf16.msra.mxu0 %v770
      %789 = vmatprep.subr.bf16.mxu0 0
      %790 = vmatpush1.bf16.msra.mxu0 %v771
      %791 = vmatprep.subr.bf16.mxu0 0
      %792 = vmatpush1.bf16.msra.mxu0 %v772
      %793 = vmatprep.subr.bf16.mxu0 0
      %794 = vmatpush1.bf16.msra.mxu0 %v773
      %795 = vmatprep.subr.bf16.mxu0 0
      %796 = vmatpush1.bf16.msra.mxu0 %v774
      %797 = vmatprep.subr.bf16.mxu0 0
      %798 = vmatpush1.bf16.msra.mxu0 %v775
      %799 = vmatprep.subr.bf16.mxu0 0
      %800 = vmatpush1.bf16.msra.mxu0 %v776
      %801 = vmatprep.subr.bf16.mxu0 0
      %802 = vmatpush1.bf16.msra.mxu0 0
      %803 = vmatprep.subr.bf16.mxu0 0
      %804 = vmatpush1.bf16.msra.mxu0 0
      %805 = vmatprep.subr.bf16.mxu0 0
      %806 = vmatpush1.bf16.msra.mxu0 0
      %807 = vmatprep.subr.bf16.mxu0 0
      %808 = vmatpush1.bf16.msra.mxu0 0
      %809 = vmatprep.subr.bf16.mxu0 0
      %810 = vmatpush1.bf16.msra.mxu0 0
      %811 = vmatprep.subr.bf16.mxu0 0
      %812 = vmatpush1.bf16.msra.mxu0 0
      %813 = vmatprep.subr.bf16.mxu0 0
      %814 = vmatpush1.bf16.msra.mxu0 0
      %815 = vmatprep.subr.bf16.mxu0 0
      %816 = vmatpush1.bf16.msra.mxu0 0
      %817 = vmatprep.mubr.bf16.mxu0 0
      %818 = vmatmul.mubr.bf16.gmra.mrb[0].mxu0 %v735
      %v819 = vpop.f32.mrb[0].mxu0
      %v820 = vadd.f32 0.0, %v819
      %v821 = vpop.f32.mrb[0].mxu0
      %v822 = vpop.f32.mrb[0].mxu0
      %v823 = vadd.f32 0.0, %v822
      %v824 = vpop.f32.mrb[0].mxu0
      %825 = vdwg.mxu0
      %v826 = vadd.f32 %v716, %v820
      %v827 = vadd.f32 %v717, %v823
      %v828 = vld [vmem:[%s3] sm:$0x1]
      %v830 = vlaneseq
      %v831 = vshrl.u32 %v830, 7
      %v832 = vsub.s32 0, %v831
      %v833 = vrot.slane %v828, %v832
      %v835 = vadd.f32 %v826, %v833
      %v836 = vadd.f32 %v827, %v833
      %vm837 = vcmp.gt.f32.partialorder %v835, 0.0
      %vm838 = vcmp.gt.f32.partialorder %v836, 0.0
      %v839 = vmul.f32 %v835, 0.01
      %v840 = vmul.f32 %v836, 0.01
      %v841 = vsel %vm837, %v835, %v839
      %v842 = vsel %vm838, %v836, %v840
      %v843 = vpack.c.bf16 %v842, %v841
      %v844 = vld [vmem:[%s4] sm:$0xf]
      %v845 = vld [vmem:[%s4 + $0x4] sm:$0xf]
      %v846 = vld [vmem:[%s4 + $0x8] sm:$0xf]
      %v847 = vld [vmem:[%s4 + $0xc] sm:$0xf]
      %v848 = vld [vmem:[%s4 + $0x10] sm:$0xf]
      %v849 = vld [vmem:[%s4 + $0x14] sm:$0xf]
      %v850 = vld [vmem:[%s4 + $0x18] sm:$0xf]
      %v851 = vld [vmem:[%s4 + $0x1c] sm:$0xf]
      %v852 = vld [vmem:[%s4 + $0x20] sm:$0xf]
      %v853 = vld [vmem:[%s4 + $0x24] sm:$0xf]
      %v854 = vld [vmem:[%s4 + $0x28] sm:$0xf]
      %v855 = vld [vmem:[%s4 + $0x2c] sm:$0xf]
      %v856 = vld [vmem:[%s4 + $0x30] sm:$0xf]
      %v857 = vld [vmem:[%s4 + $0x34] sm:$0xf]
      %v858 = vld [vmem:[%s4 + $0x38] sm:$0xf]
      %v859 = vld [vmem:[%s4 + $0x3c] sm:$0xf]
      %s860 = scalar_lea.vmem %s4, 64
      %v861 = vld [vmem:[%s860] sm:$0xf]
      %v862 = vld [vmem:[%s860 + $0x4] sm:$0xf]
      %v863 = vld [vmem:[%s860 + $0x8] sm:$0xf]
      %v864 = vld [vmem:[%s860 + $0xc] sm:$0xf]
      %v865 = vld [vmem:[%s860 + $0x10] sm:$0xf]
      %v866 = vld [vmem:[%s860 + $0x14] sm:$0xf]
      %v867 = vld [vmem:[%s860 + $0x18] sm:$0xf]
      %v868 = vld [vmem:[%s860 + $0x1c] sm:$0xf]
      %v869 = vld [vmem:[%s860 + $0x20] sm:$0xf]
      %v870 = vld [vmem:[%s860 + $0x24] sm:$0xf]
      %v871 = vld [vmem:[%s860 + $0x28] sm:$0xf]
      %v872 = vld [vmem:[%s860 + $0x2c] sm:$0xf]
      %v873 = vld [vmem:[%s860 + $0x30] sm:$0xf]
      %v874 = vld [vmem:[%s860 + $0x34] sm:$0xf]
      %v875 = vld [vmem:[%s860 + $0x38] sm:$0xf]
      %v876 = vld [vmem:[%s860 + $0x3c] sm:$0xf]
      %v878 = vshrl.u32 %v843, 16
      %v880 = vshll.u32 %v843, 16
      %v882 = vrot.slane %v880, 1
      %v883 = vor.u32 %v878, %v882
      %v901 = vunpack.c.l.b16 %v861
      %v902 = vunpack.c.l.b16 %v862
      %v903 = vunpack.c.l.b16 %v863
      %v904 = vunpack.c.l.b16 %v864
      %v905 = vunpack.c.l.b16 %v865
      %v906 = vunpack.c.l.b16 %v866
      %v907 = vunpack.c.l.b16 %v867
      %v908 = vunpack.c.l.b16 %v868
      %v909 = vunpack.c.l.b16 %v869
      %v910 = vunpack.c.l.b16 %v870
      %v911 = vunpack.c.l.b16 %v871
      %v912 = vunpack.c.l.b16 %v872
      %v913 = vunpack.c.l.b16 %v873
      %v914 = vunpack.c.l.b16 %v874
      %v915 = vunpack.c.l.b16 %v875
      %v916 = vunpack.c.l.b16 %v876
      %v917 = vpack.c.b16 %v902, %v901
      %v918 = vpack.c.b16 %v904, %v903
      %v919 = vpack.c.b16 %v906, %v905
      %v920 = vpack.c.b16 %v908, %v907
      %v921 = vpack.c.b16 %v910, %v909
      %v922 = vpack.c.b16 %v912, %v911
      %v923 = vpack.c.b16 %v914, %v913
      %v924 = vpack.c.b16 %v916, %v915
      %933 = vmatprep.subr.bf16.mxu0 0
      %934 = vmatpush1.bf16.msra.mxu0 %v917
      %935 = vmatprep.subr.bf16.mxu0 0
      %936 = vmatpush1.bf16.msra.mxu0 %v918
      %937 = vmatprep.subr.bf16.mxu0 0
      %938 = vmatpush1.bf16.msra.mxu0 %v919
      %939 = vmatprep.subr.bf16.mxu0 0
      %940 = vmatpush1.bf16.msra.mxu0 %v920
      %941 = vmatprep.subr.bf16.mxu0 0
      %942 = vmatpush1.bf16.msra.mxu0 %v921
      %943 = vmatprep.subr.bf16.mxu0 0
      %944 = vmatpush1.bf16.msra.mxu0 %v922
      %945 = vmatprep.subr.bf16.mxu0 0
      %946 = vmatpush1.bf16.msra.mxu0 %v923
      %947 = vmatprep.subr.bf16.mxu0 0
      %948 = vmatpush1.bf16.msra.mxu0 %v924
      %949 = vmatprep.subr.bf16.mxu0 0
      %950 = vmatpush1.bf16.msra.mxu0 0
      %951 = vmatprep.subr.bf16.mxu0 0
      %952 = vmatpush1.bf16.msra.mxu0 0
      %953 = vmatprep.subr.bf16.mxu0 0
      %954 = vmatpush1.bf16.msra.mxu0 0
      %955 = vmatprep.subr.bf16.mxu0 0
      %956 = vmatpush1.bf16.msra.mxu0 0
      %957 = vmatprep.subr.bf16.mxu0 0
      %958 = vmatpush1.bf16.msra.mxu0 0
      %959 = vmatprep.subr.bf16.mxu0 0
      %960 = vmatpush1.bf16.msra.mxu0 0
      %961 = vmatprep.subr.bf16.mxu0 0
      %962 = vmatpush1.bf16.msra.mxu0 0
      %963 = vmatprep.subr.bf16.mxu0 0
      %964 = vmatpush1.bf16.msra.mxu0 0
      %965 = vmatprep.mubr.bf16.mxu0 0
      %966 = vmatmul.mubr.bf16.gmra.mrb[0].mxu0 %v883
      %v967 = vpop.f32.mrb[0].mxu0
      %v968 = vadd.f32 0.0, %v967
      %v969 = vpop.f32.mrb[0].mxu0
      %v970 = vpop.f32.mrb[0].mxu0
      %v971 = vpop.f32.mrb[0].mxu0
      %972 = vdwg.mxu0
      %v989 = vunpack.c.l.b16 %v844
      %v990 = vunpack.c.l.b16 %v845
      %v991 = vunpack.c.l.b16 %v846
      %v992 = vunpack.c.l.b16 %v847
      %v993 = vunpack.c.l.b16 %v848
      %v994 = vunpack.c.l.b16 %v849
      %v995 = vunpack.c.l.b16 %v850
      %v996 = vunpack.c.l.b16 %v851
      %v997 = vunpack.c.l.b16 %v852
      %v998 = vunpack.c.l.b16 %v853
      %v999 = vunpack.c.l.b16 %v854
      %v1000 = vunpack.c.l.b16 %v855
      %v1001 = vunpack.c.l.b16 %v856
      %v1002 = vunpack.c.l.b16 %v857
      %v1003 = vunpack.c.l.b16 %v858
      %v1004 = vunpack.c.l.b16 %v859
      %v1005 = vpack.c.b16 %v990, %v989
      %v1006 = vpack.c.b16 %v992, %v991
      %v1007 = vpack.c.b16 %v994, %v993
      %v1008 = vpack.c.b16 %v996, %v995
      %v1009 = vpack.c.b16 %v998, %v997
      %v1010 = vpack.c.b16 %v1000, %v999
      %v1011 = vpack.c.b16 %v1002, %v1001
      %v1012 = vpack.c.b16 %v1004, %v1003
      %1021 = vmatprep.subr.bf16.mxu0 0
      %1022 = vmatpush1.bf16.msra.mxu0 %v1005
      %1023 = vmatprep.subr.bf16.mxu0 0
      %1024 = vmatpush1.bf16.msra.mxu0 %v1006
      %1025 = vmatprep.subr.bf16.mxu0 0
      %1026 = vmatpush1.bf16.msra.mxu0 %v1007
      %1027 = vmatprep.subr.bf16.mxu0 0
      %1028 = vmatpush1.bf16.msra.mxu0 %v1008
      %1029 = vmatprep.subr.bf16.mxu0 0
      %1030 = vmatpush1.bf16.msra.mxu0 %v1009
      %1031 = vmatprep.subr.bf16.mxu0 0
      %1032 = vmatpush1.bf16.msra.mxu0 %v1010
      %1033 = vmatprep.subr.bf16.mxu0 0
      %1034 = vmatpush1.bf16.msra.mxu0 %v1011
      %1035 = vmatprep.subr.bf16.mxu0 0
      %1036 = vmatpush1.bf16.msra.mxu0 %v1012
      %1037 = vmatprep.subr.bf16.mxu0 0
      %1038 = vmatpush1.bf16.msra.mxu0 0
      %1039 = vmatprep.subr.bf16.mxu0 0
      %1040 = vmatpush1.bf16.msra.mxu0 0
      %1041 = vmatprep.subr.bf16.mxu0 0
      %1042 = vmatpush1.bf16.msra.mxu0 0
      %1043 = vmatprep.subr.bf16.mxu0 0
      %1044 = vmatpush1.bf16.msra.mxu0 0
      %1045 = vmatprep.subr.bf16.mxu0 0
      %1046 = vmatpush1.bf16.msra.mxu0 0
      %1047 = vmatprep.subr.bf16.mxu0 0
      %1048 = vmatpush1.bf16.msra.mxu0 0
      %1049 = vmatprep.subr.bf16.mxu0 0
      %1050 = vmatpush1.bf16.msra.mxu0 0
      %1051 = vmatprep.subr.bf16.mxu0 0
      %1052 = vmatpush1.bf16.msra.mxu0 0
      %1053 = vmatprep.mubr.bf16.mxu0 0
      %1054 = vmatmul.mubr.bf16.gmra.mrb[0].mxu0 %v843
      %v1055 = vpop.f32.mrb[0].mxu0
      %v1056 = vadd.f32 %v968, %v1055
      %v1057 = vpop.f32.mrb[0].mxu0
      %v1058 = vpop.f32.mrb[0].mxu0
      %v1059 = vpop.f32.mrb[0].mxu0
      %1060 = vdwg.mxu0
      %s1061 = scalar_lea.vmem %s4, 128
      %v1062 = vld [vmem:[%s1061] sm:$0xf]
      %v1063 = vld [vmem:[%s1061 + $0x4] sm:$0xf]
      %v1064 = vld [vmem:[%s1061 + $0x8] sm:$0xf]
      %v1065 = vld [vmem:[%s1061 + $0xc] sm:$0xf]
      %v1066 = vld [vmem:[%s1061 + $0x10] sm:$0xf]
      %v1067 = vld [vmem:[%s1061 + $0x14] sm:$0xf]
      %v1068 = vld [vmem:[%s1061 + $0x18] sm:$0xf]
      %v1069 = vld [vmem:[%s1061 + $0x1c] sm:$0xf]
      %v1070 = vld [vmem:[%s1061 + $0x20] sm:$0xf]
      %v1071 = vld [vmem:[%s1061 + $0x24] sm:$0xf]
      %v1072 = vld [vmem:[%s1061 + $0x28] sm:$0xf]
      %v1073 = vld [vmem:[%s1061 + $0x2c] sm:$0xf]
      %v1074 = vld [vmem:[%s1061 + $0x30] sm:$0xf]
      %v1075 = vld [vmem:[%s1061 + $0x34] sm:$0xf]
      %v1076 = vld [vmem:[%s1061 + $0x38] sm:$0xf]
      %v1077 = vld [vmem:[%s1061 + $0x3c] sm:$0xf]
      %v1079 = vrot.slane %v843, 1
      %v1097 = vunpack.c.l.b16 %v1062
      %v1098 = vunpack.c.l.b16 %v1063
      %v1099 = vunpack.c.l.b16 %v1064
      %v1100 = vunpack.c.l.b16 %v1065
      %v1101 = vunpack.c.l.b16 %v1066
      %v1102 = vunpack.c.l.b16 %v1067
      %v1103 = vunpack.c.l.b16 %v1068
      %v1104 = vunpack.c.l.b16 %v1069
      %v1105 = vunpack.c.l.b16 %v1070
      %v1106 = vunpack.c.l.b16 %v1071
      %v1107 = vunpack.c.l.b16 %v1072
      %v1108 = vunpack.c.l.b16 %v1073
      %v1109 = vunpack.c.l.b16 %v1074
      %v1110 = vunpack.c.l.b16 %v1075
      %v1111 = vunpack.c.l.b16 %v1076
      %v1112 = vunpack.c.l.b16 %v1077
      %v1113 = vpack.c.b16 %v1098, %v1097
      %v1114 = vpack.c.b16 %v1100, %v1099
      %v1115 = vpack.c.b16 %v1102, %v1101
      %v1116 = vpack.c.b16 %v1104, %v1103
      %v1117 = vpack.c.b16 %v1106, %v1105
      %v1118 = vpack.c.b16 %v1108, %v1107
      %v1119 = vpack.c.b16 %v1110, %v1109
      %v1120 = vpack.c.b16 %v1112, %v1111
      %1129 = vmatprep.subr.bf16.mxu0 0
      %1130 = vmatpush1.bf16.msra.mxu0 %v1113
      %1131 = vmatprep.subr.bf16.mxu0 0
      %1132 = vmatpush1.bf16.msra.mxu0 %v1114
      %1133 = vmatprep.subr.bf16.mxu0 0
      %1134 = vmatpush1.bf16.msra.mxu0 %v1115
      %1135 = vmatprep.subr.bf16.mxu0 0
      %1136 = vmatpush1.bf16.msra.mxu0 %v1116
      %1137 = vmatprep.subr.bf16.mxu0 0
      %1138 = vmatpush1.bf16.msra.mxu0 %v1117
      %1139 = vmatprep.subr.bf16.mxu0 0
      %1140 = vmatpush1.bf16.msra.mxu0 %v1118
      %1141 = vmatprep.subr.bf16.mxu0 0
      %1142 = vmatpush1.bf16.msra.mxu0 %v1119
      %1143 = vmatprep.subr.bf16.mxu0 0
      %1144 = vmatpush1.bf16.msra.mxu0 %v1120
      %1145 = vmatprep.subr.bf16.mxu0 0
      %1146 = vmatpush1.bf16.msra.mxu0 0
      %1147 = vmatprep.subr.bf16.mxu0 0
      %1148 = vmatpush1.bf16.msra.mxu0 0
      %1149 = vmatprep.subr.bf16.mxu0 0
      %1150 = vmatpush1.bf16.msra.mxu0 0
      %1151 = vmatprep.subr.bf16.mxu0 0
      %1152 = vmatpush1.bf16.msra.mxu0 0
      %1153 = vmatprep.subr.bf16.mxu0 0
      %1154 = vmatpush1.bf16.msra.mxu0 0
      %1155 = vmatprep.subr.bf16.mxu0 0
      %1156 = vmatpush1.bf16.msra.mxu0 0
      %1157 = vmatprep.subr.bf16.mxu0 0
      %1158 = vmatpush1.bf16.msra.mxu0 0
      %1159 = vmatprep.subr.bf16.mxu0 0
      %1160 = vmatpush1.bf16.msra.mxu0 0
      %1161 = vmatprep.mubr.bf16.mxu0 0
      %1162 = vmatmul.mubr.bf16.gmra.mrb[0].mxu0 %v1079
      %v1163 = vpop.f32.mrb[0].mxu0
      %v1164 = vadd.f32 0.0, %v1163
      %v1165 = vpop.f32.mrb[0].mxu0
      %v1166 = vpop.f32.mrb[0].mxu0
      %v1167 = vpop.f32.mrb[0].mxu0
      %1168 = vdwg.mxu0
      %v1169 = vadd.f32 %v1056, %v1164
      %v1170 = vld [vmem:[%s5] sm:$0x1]
      %v1172 = vlaneseq
      %v1173 = vshrl.u32 %v1172, 7
      %v1174 = vsub.s32 0, %v1173
      %v1175 = vrot.slane %v1170, %v1174
      %v1177 = vadd.f32 %v1169, %v1175
      %v1178 = vtanh.pop %v1177
      %v1179 = vmul.f32 %v1178, 1.442695
      %v1180 = vpow.pop %v1179
      %1181 = vrot.lane.b32.xlu0 %v270, 64
      %v1182 = vpop.permute.xlu0 %1181
      %v1183 = vmul.f32 %v1182, %v1180
      %v1184 = vpack.c.bf16 %v1183, %v1183
      %v1186 = vpack.i.b16 %v1184, %v1184
      %v1188 = vlaneseq
      %v1189 = vshrl.u32 %v1188, 7
      %v1190 = vsub.s32 0, %v1189
      %v1191 = vrot.slane %v1186, %v1190
      %v1192 = vshrl.u32 %v1184, 16
      %v1193 = vpack.i.b16 %v1192, %v1192
      %v1195 = vlaneseq
      %v1196 = vshrl.u32 %v1195, 7
      %v1197 = vsub.s32 3, %v1196
      %v1198 = vrot.slane %v1193, %v1197
      %v1200 = vrot.slane %v1192, 6
      %v1201 = vshll.u32 %v1184, 16
      %v1203 = vrot.slane %v1201, 7
      %v1204 = vor.u32 %v1200, %v1203
      %vm1206 = vcmask 1041408
      %vm1207 = vsmask.f32 1280
      %vm1208 = vmand %vm1206, %vm1207
      %v1209 = vsel %vm1208, %v1191, %v1204
      %vm1210 = vcmask 1045504
      %vm1211 = vsmask.f32 5376
      %vm1212 = vmand %vm1210, %vm1211
      %v1213 = vsel %vm1212, %v1209, %v1198
      %s1214 = scalar_lea.vmem %s2, 320
      %v1215 = vld [vmem:[%s1214] sm:$0xf]
      %v1216 = vld [vmem:[%s1214 + $0x4] sm:$0xf]
      %v1217 = vld [vmem:[%s1214 + $0x8] sm:$0xf]
      %v1218 = vld [vmem:[%s1214 + $0xc] sm:$0xf]
      %v1219 = vld [vmem:[%s1214 + $0x10] sm:$0xf]
      %v1220 = vld [vmem:[%s1214 + $0x14] sm:$0xf]
      %v1221 = vld [vmem:[%s1214 + $0x18] sm:$0xf]
      %v1222 = vld [vmem:[%s1214 + $0x1c] sm:$0xf]
      %v1223 = vld [vmem:[%s1214 + $0x20] sm:$0xf]
      %v1224 = vld [vmem:[%s1214 + $0x24] sm:$0xf]
      %v1225 = vld [vmem:[%s1214 + $0x28] sm:$0xf]
      %v1226 = vld [vmem:[%s1214 + $0x2c] sm:$0xf]
      %v1227 = vld [vmem:[%s1214 + $0x30] sm:$0xf]
      %v1228 = vld [vmem:[%s1214 + $0x34] sm:$0xf]
      %v1229 = vld [vmem:[%s1214 + $0x38] sm:$0xf]
      %v1230 = vld [vmem:[%s1214 + $0x3c] sm:$0xf]
      %s1231 = scalar_lea.vmem %s2, 384
      %v1232 = vld [vmem:[%s1231] sm:$0xf]
      %v1233 = vld [vmem:[%s1231 + $0x4] sm:$0xf]
      %v1234 = vld [vmem:[%s1231 + $0x8] sm:$0xf]
      %v1235 = vld [vmem:[%s1231 + $0xc] sm:$0xf]
      %v1236 = vld [vmem:[%s1231 + $0x10] sm:$0xf]
      %v1237 = vld [vmem:[%s1231 + $0x14] sm:$0xf]
      %v1238 = vld [vmem:[%s1231 + $0x18] sm:$0xf]
      %v1239 = vld [vmem:[%s1231 + $0x1c] sm:$0xf]
      %v1240 = vld [vmem:[%s1231 + $0x20] sm:$0xf]
      %v1241 = vld [vmem:[%s1231 + $0x24] sm:$0xf]
      %v1242 = vld [vmem:[%s1231 + $0x28] sm:$0xf]
      %v1243 = vld [vmem:[%s1231 + $0x2c] sm:$0xf]
      %v1244 = vld [vmem:[%s1231 + $0x30] sm:$0xf]
      %v1245 = vld [vmem:[%s1231 + $0x34] sm:$0xf]
      %v1246 = vld [vmem:[%s1231 + $0x38] sm:$0xf]
      %v1247 = vld [vmem:[%s1231 + $0x3c] sm:$0xf]
      %v1249 = vshrl.u32 %v1213, 16
      %v1251 = vshll.u32 %v1213, 16
      %v1253 = vrot.slane %v1251, 1
      %v1254 = vor.u32 %v1249, %v1253
      %v1272 = vunpack.c.l.b16 %v1232
      %v1273 = vunpack.c.l.b16 %v1233
      %v1274 = vunpack.c.l.b16 %v1234
      %v1275 = vunpack.c.l.b16 %v1235
      %v1276 = vunpack.c.l.b16 %v1236
      %v1277 = vunpack.c.l.b16 %v1237
      %v1278 = vunpack.c.l.b16 %v1238
      %v1279 = vunpack.c.l.b16 %v1239
      %v1280 = vunpack.c.l.b16 %v1240
      %v1281 = vunpack.c.l.b16 %v1241
      %v1282 = vunpack.c.l.b16 %v1242
      %v1283 = vunpack.c.l.b16 %v1243
      %v1284 = vunpack.c.l.b16 %v1244
      %v1285 = vunpack.c.l.b16 %v1245
      %v1286 = vunpack.c.l.b16 %v1246
      %v1287 = vunpack.c.l.b16 %v1247
      %v1288 = vpack.c.b16 %v1273, %v1272
      %v1289 = vpack.c.b16 %v1275, %v1274
      %v1290 = vpack.c.b16 %v1277, %v1276
      %v1291 = vpack.c.b16 %v1279, %v1278
      %v1292 = vpack.c.b16 %v1281, %v1280
      %v1293 = vpack.c.b16 %v1283, %v1282
      %v1294 = vpack.c.b16 %v1285, %v1284
      %v1295 = vpack.c.b16 %v1287, %v1286
      %1304 = vmatprep.subr.bf16.mxu0 0
      %1305 = vmatpush1.bf16.msra.mxu0 %v1288
      %1306 = vmatprep.subr.bf16.mxu0 0
      %1307 = vmatpush1.bf16.msra.mxu0 %v1289
      %1308 = vmatprep.subr.bf16.mxu0 0
      %1309 = vmatpush1.bf16.msra.mxu0 %v1290
      %1310 = vmatprep.subr.bf16.mxu0 0
      %1311 = vmatpush1.bf16.msra.mxu0 %v1291
      %1312 = vmatprep.subr.bf16.mxu0 0
      %1313 = vmatpush1.bf16.msra.mxu0 %v1292
      %1314 = vmatprep.subr.bf16.mxu0 0
      %1315 = vmatpush1.bf16.msra.mxu0 %v1293
      %1316 = vmatprep.subr.bf16.mxu0 0
      %1317 = vmatpush1.bf16.msra.mxu0 %v1294
      %1318 = vmatprep.subr.bf16.mxu0 0
      %1319 = vmatpush1.bf16.msra.mxu0 %v1295
      %1320 = vmatprep.subr.bf16.mxu0 0
      %1321 = vmatpush1.bf16.msra.mxu0 0
      %1322 = vmatprep.subr.bf16.mxu0 0
      %1323 = vmatpush1.bf16.msra.mxu0 0
      %1324 = vmatprep.subr.bf16.mxu0 0
      %1325 = vmatpush1.bf16.msra.mxu0 0
      %1326 = vmatprep.subr.bf16.mxu0 0
      %1327 = vmatpush1.bf16.msra.mxu0 0
      %1328 = vmatprep.subr.bf16.mxu0 0
      %1329 = vmatpush1.bf16.msra.mxu0 0
      %1330 = vmatprep.subr.bf16.mxu0 0
      %1331 = vmatpush1.bf16.msra.mxu0 0
      %1332 = vmatprep.subr.bf16.mxu0 0
      %1333 = vmatpush1.bf16.msra.mxu0 0
      %1334 = vmatprep.subr.bf16.mxu0 0
      %1335 = vmatpush1.bf16.msra.mxu0 0
      %1336 = vmatprep.mubr.bf16.mxu0 0
      %1337 = vmatmul.mubr.bf16.gmra.mrb[0].mxu0 %v1254
      %v1338 = vpop.f32.mrb[0].mxu0
      %v1339 = vadd.f32 0.0, %v1338
      %v1340 = vpop.f32.mrb[0].mxu0
      %v1341 = vpop.f32.mrb[0].mxu0
      %v1342 = vadd.f32 0.0, %v1341
      %v1343 = vpop.f32.mrb[0].mxu0
      %1344 = vdwg.mxu0
      %v1361 = vunpack.c.l.b16 %v1215
      %v1362 = vunpack.c.l.b16 %v1216
      %v1363 = vunpack.c.l.b16 %v1217
      %v1364 = vunpack.c.l.b16 %v1218
      %v1365 = vunpack.c.l.b16 %v1219
      %v1366 = vunpack.c.l.b16 %v1220
      %v1367 = vunpack.c.l.b16 %v1221
      %v1368 = vunpack.c.l.b16 %v1222
      %v1369 = vunpack.c.l.b16 %v1223
      %v1370 = vunpack.c.l.b16 %v1224
      %v1371 = vunpack.c.l.b16 %v1225
      %v1372 = vunpack.c.l.b16 %v1226
      %v1373 = vunpack.c.l.b16 %v1227
      %v1374 = vunpack.c.l.b16 %v1228
      %v1375 = vunpack.c.l.b16 %v1229
      %v1376 = vunpack.c.l.b16 %v1230
      %v1377 = vpack.c.b16 %v1362, %v1361
      %v1378 = vpack.c.b16 %v1364, %v1363
      %v1379 = vpack.c.b16 %v1366, %v1365
      %v1380 = vpack.c.b16 %v1368, %v1367
      %v1381 = vpack.c.b16 %v1370, %v1369
      %v1382 = vpack.c.b16 %v1372, %v1371
      %v1383 = vpack.c.b16 %v1374, %v1373
      %v1384 = vpack.c.b16 %v1376, %v1375
      %1393 = vmatprep.subr.bf16.mxu0 0
      %1394 = vmatpush1.bf16.msra.mxu0 %v1377
      %1395 = vmatprep.subr.bf16.mxu0 0
      %1396 = vmatpush1.bf16.msra.mxu0 %v1378
      %1397 = vmatprep.subr.bf16.mxu0 0
      %1398 = vmatpush1.bf16.msra.mxu0 %v1379
      %1399 = vmatprep.subr.bf16.mxu0 0
      %1400 = vmatpush1.bf16.msra.mxu0 %v1380
      %1401 = vmatprep.subr.bf16.mxu0 0
      %1402 = vmatpush1.bf16.msra.mxu0 %v1381
      %1403 = vmatprep.subr.bf16.mxu0 0
      %1404 = vmatpush1.bf16.msra.mxu0 %v1382
      %1405 = vmatprep.subr.bf16.mxu0 0
      %1406 = vmatpush1.bf16.msra.mxu0 %v1383
      %1407 = vmatprep.subr.bf16.mxu0 0
      %1408 = vmatpush1.bf16.msra.mxu0 %v1384
      %1409 = vmatprep.subr.bf16.mxu0 0
      %1410 = vmatpush1.bf16.msra.mxu0 0
      %1411 = vmatprep.subr.bf16.mxu0 0
      %1412 = vmatpush1.bf16.msra.mxu0 0
      %1413 = vmatprep.subr.bf16.mxu0 0
      %1414 = vmatpush1.bf16.msra.mxu0 0
      %1415 = vmatprep.subr.bf16.mxu0 0
      %1416 = vmatpush1.bf16.msra.mxu0 0
      %1417 = vmatprep.subr.bf16.mxu0 0
      %1418 = vmatpush1.bf16.msra.mxu0 0
      %1419 = vmatprep.subr.bf16.mxu0 0
      %1420 = vmatpush1.bf16.msra.mxu0 0
      %1421 = vmatprep.subr.bf16.mxu0 0
      %1422 = vmatpush1.bf16.msra.mxu0 0
      %1423 = vmatprep.subr.bf16.mxu0 0
      %1424 = vmatpush1.bf16.msra.mxu0 0
      %1425 = vmatprep.mubr.bf16.mxu0 0
      %1426 = vmatmul.mubr.bf16.gmra.mrb[0].mxu0 %v1213
      %v1427 = vpop.f32.mrb[0].mxu0
      %v1428 = vadd.f32 %v1339, %v1427
      %v1429 = vpop.f32.mrb[0].mxu0
      %v1430 = vpop.f32.mrb[0].mxu0
      %v1431 = vadd.f32 %v1342, %v1430
      %v1432 = vpop.f32.mrb[0].mxu0
      %1433 = vdwg.mxu0
      %s1434 = scalar_lea.vmem %s2, 448
      %v1435 = vld [vmem:[%s1434] sm:$0xf]
      %v1436 = vld [vmem:[%s1434 + $0x4] sm:$0xf]
      %v1437 = vld [vmem:[%s1434 + $0x8] sm:$0xf]
      %v1438 = vld [vmem:[%s1434 + $0xc] sm:$0xf]
      %v1439 = vld [vmem:[%s1434 + $0x10] sm:$0xf]
      %v1440 = vld [vmem:[%s1434 + $0x14] sm:$0xf]
      %v1441 = vld [vmem:[%s1434 + $0x18] sm:$0xf]
      %v1442 = vld [vmem:[%s1434 + $0x1c] sm:$0xf]
      %v1443 = vld [vmem:[%s1434 + $0x20] sm:$0xf]
      %v1444 = vld [vmem:[%s1434 + $0x24] sm:$0xf]
      %v1445 = vld [vmem:[%s1434 + $0x28] sm:$0xf]
      %v1446 = vld [vmem:[%s1434 + $0x2c] sm:$0xf]
      %v1447 = vld [vmem:[%s1434 + $0x30] sm:$0xf]
      %v1448 = vld [vmem:[%s1434 + $0x34] sm:$0xf]
      %v1449 = vld [vmem:[%s1434 + $0x38] sm:$0xf]
      %v1450 = vld [vmem:[%s1434 + $0x3c] sm:$0xf]
      %v1452 = vrot.slane %v1213, 1
      %v1470 = vunpack.c.l.b16 %v1435
      %v1471 = vunpack.c.l.b16 %v1436
      %v1472 = vunpack.c.l.b16 %v1437
      %v1473 = vunpack.c.l.b16 %v1438
      %v1474 = vunpack.c.l.b16 %v1439
      %v1475 = vunpack.c.l.b16 %v1440
      %v1476 = vunpack.c.l.b16 %v1441
      %v1477 = vunpack.c.l.b16 %v1442
      %v1478 = vunpack.c.l.b16 %v1443
      %v1479 = vunpack.c.l.b16 %v1444
      %v1480 = vunpack.c.l.b16 %v1445
      %v1481 = vunpack.c.l.b16 %v1446
      %v1482 = vunpack.c.l.b16 %v1447
      %v1483 = vunpack.c.l.b16 %v1448
      %v1484 = vunpack.c.l.b16 %v1449
      %v1485 = vunpack.c.l.b16 %v1450
      %v1486 = vpack.c.b16 %v1471, %v1470
      %v1487 = vpack.c.b16 %v1473, %v1472
      %v1488 = vpack.c.b16 %v1475, %v1474
      %v1489 = vpack.c.b16 %v1477, %v1476
      %v1490 = vpack.c.b16 %v1479, %v1478
      %v1491 = vpack.c.b16 %v1481, %v1480
      %v1492 = vpack.c.b16 %v1483, %v1482
      %v1493 = vpack.c.b16 %v1485, %v1484
      %1502 = vmatprep.subr.bf16.mxu0 0
      %1503 = vmatpush1.bf16.msra.mxu0 %v1486
      %1504 = vmatprep.subr.bf16.mxu0 0
      %1505 = vmatpush1.bf16.msra.mxu0 %v1487
      %1506 = vmatprep.subr.bf16.mxu0 0
      %1507 = vmatpush1.bf16.msra.mxu0 %v1488
      %1508 = vmatprep.subr.bf16.mxu0 0
      %1509 = vmatpush1.bf16.msra.mxu0 %v1489
      %1510 = vmatprep.subr.bf16.mxu0 0
      %1511 = vmatpush1.bf16.msra.mxu0 %v1490
      %1512 = vmatprep.subr.bf16.mxu0 0
      %1513 = vmatpush1.bf16.msra.mxu0 %v1491
      %1514 = vmatprep.subr.bf16.mxu0 0
      %1515 = vmatpush1.bf16.msra.mxu0 %v1492
      %1516 = vmatprep.subr.bf16.mxu0 0
      %1517 = vmatpush1.bf16.msra.mxu0 %v1493
      %1518 = vmatprep.subr.bf16.mxu0 0
      %1519 = vmatpush1.bf16.msra.mxu0 0
      %1520 = vmatprep.subr.bf16.mxu0 0
      %1521 = vmatpush1.bf16.msra.mxu0 0
      %1522 = vmatprep.subr.bf16.mxu0 0
      %1523 = vmatpush1.bf16.msra.mxu0 0
      %1524 = vmatprep.subr.bf16.mxu0 0
      %1525 = vmatpush1.bf16.msra.mxu0 0
      %1526 = vmatprep.subr.bf16.mxu0 0
      %1527 = vmatpush1.bf16.msra.mxu0 0
      %1528 = vmatprep.subr.bf16.mxu0 0
      %1529 = vmatpush1.bf16.msra.mxu0 0
      %1530 = vmatprep.subr.bf16.mxu0 0
      %1531 = vmatpush1.bf16.msra.mxu0 0
      %1532 = vmatprep.subr.bf16.mxu0 0
      %1533 = vmatpush1.bf16.msra.mxu0 0
      %1534 = vmatprep.mubr.bf16.mxu0 0
      %1535 = vmatmul.mubr.bf16.gmra.mrb[0].mxu0 %v1452
      %v1536 = vpop.f32.mrb[0].mxu0
      %v1537 = vadd.f32 0.0, %v1536
      %v1538 = vpop.f32.mrb[0].mxu0
      %v1539 = vpop.f32.mrb[0].mxu0
      %v1540 = vadd.f32 0.0, %v1539
      %v1541 = vpop.f32.mrb[0].mxu0
      %1542 = vdwg.mxu0
      %v1543 = vadd.f32 %v1428, %v1537
      %v1544 = vadd.f32 %v1431, %v1540
      %s1545 = scalar_lea.vmem %s2, 512
      %v1546 = vld [vmem:[%s1545] sm:$0xf]
      %v1547 = vld [vmem:[%s1545 + $0x4] sm:$0xf]
      %v1548 = vld [vmem:[%s1545 + $0x8] sm:$0xf]
      %v1549 = vld [vmem:[%s1545 + $0xc] sm:$0xf]
      %v1550 = vld [vmem:[%s1545 + $0x10] sm:$0xf]
      %v1551 = vld [vmem:[%s1545 + $0x14] sm:$0xf]
      %v1552 = vld [vmem:[%s1545 + $0x18] sm:$0xf]
      %v1553 = vld [vmem:[%s1545 + $0x1c] sm:$0xf]
      %v1554 = vld [vmem:[%s1545 + $0x20] sm:$0xf]
      %v1555 = vld [vmem:[%s1545 + $0x24] sm:$0xf]
      %v1556 = vld [vmem:[%s1545 + $0x28] sm:$0xf]
      %v1557 = vld [vmem:[%s1545 + $0x2c] sm:$0xf]
      %v1558 = vld [vmem:[%s1545 + $0x30] sm:$0xf]
      %v1559 = vld [vmem:[%s1545 + $0x34] sm:$0xf]
      %v1560 = vld [vmem:[%s1545 + $0x38] sm:$0xf]
      %v1561 = vld [vmem:[%s1545 + $0x3c] sm:$0xf]
      %v1562 = vrot.slane %v1249, 1
      %v1563 = vrot.slane %v1251, 2
      %v1564 = vor.u32 %v1562, %v1563
      %v1582 = vunpack.c.l.b16 %v1546
      %v1583 = vunpack.c.l.b16 %v1547
      %v1584 = vunpack.c.l.b16 %v1548
      %v1585 = vunpack.c.l.b16 %v1549
      %v1586 = vunpack.c.l.b16 %v1550
      %v1587 = vunpack.c.l.b16 %v1551
      %v1588 = vunpack.c.l.b16 %v1552
      %v1589 = vunpack.c.l.b16 %v1553
      %v1590 = vunpack.c.l.b16 %v1554
      %v1591 = vunpack.c.l.b16 %v1555
      %v1592 = vunpack.c.l.b16 %v1556
      %v1593 = vunpack.c.l.b16 %v1557
      %v1594 = vunpack.c.l.b16 %v1558
      %v1595 = vunpack.c.l.b16 %v1559
      %v1596 = vunpack.c.l.b16 %v1560
      %v1597 = vunpack.c.l.b16 %v1561
      %v1598 = vpack.c.b16 %v1583, %v1582
      %v1599 = vpack.c.b16 %v1585, %v1584
      %v1600 = vpack.c.b16 %v1587, %v1586
      %v1601 = vpack.c.b16 %v1589, %v1588
      %v1602 = vpack.c.b16 %v1591, %v1590
      %v1603 = vpack.c.b16 %v1593, %v1592
      %v1604 = vpack.c.b16 %v1595, %v1594
      %v1605 = vpack.c.b16 %v1597, %v1596
      %1614 = vmatprep.subr.bf16.mxu0 0
      %1615 = vmatpush1.bf16.msra.mxu0 %v1598
      %1616 = vmatprep.subr.bf16.mxu0 0
      %1617 = vmatpush1.bf16.msra.mxu0 %v1599
      %1618 = vmatprep.subr.bf16.mxu0 0
      %1619 = vmatpush1.bf16.msra.mxu0 %v1600
      %1620 = vmatprep.subr.bf16.mxu0 0
      %1621 = vmatpush1.bf16.msra.mxu0 %v1601
      %1622 = vmatprep.subr.bf16.mxu0 0
      %1623 = vmatpush1.bf16.msra.mxu0 %v1602
      %1624 = vmatprep.subr.bf16.mxu0 0
      %1625 = vmatpush1.bf16.msra.mxu0 %v1603
      %1626 = vmatprep.subr.bf16.mxu0 0
      %1627 = vmatpush1.bf16.msra.mxu0 %v1604
      %1628 = vmatprep.subr.bf16.mxu0 0
      %1629 = vmatpush1.bf16.msra.mxu0 %v1605
      %1630 = vmatprep.subr.bf16.mxu0 0
      %1631 = vmatpush1.bf16.msra.mxu0 0
      %1632 = vmatprep.subr.bf16.mxu0 0
      %1633 = vmatpush1.bf16.msra.mxu0 0
      %1634 = vmatprep.subr.bf16.mxu0 0
      %1635 = vmatpush1.bf16.msra.mxu0 0
      %1636 = vmatprep.subr.bf16.mxu0 0
      %1637 = vmatpush1.bf16.msra.mxu0 0
      %1638 = vmatprep.subr.bf16.mxu0 0
      %1639 = vmatpush1.bf16.msra.mxu0 0
      %1640 = vmatprep.subr.bf16.mxu0 0
      %1641 = vmatpush1.bf16.msra.mxu0 0
      %1642 = vmatprep.subr.bf16.mxu0 0
      %1643 = vmatpush1.bf16.msra.mxu0 0
      %1644 = vmatprep.subr.bf16.mxu0 0
      %1645 = vmatpush1.bf16.msra.mxu0 0
      %1646 = vmatprep.mubr.bf16.mxu0 0
      %1647 = vmatmul.mubr.bf16.gmra.mrb[0].mxu0 %v1564
      %v1648 = vpop.f32.mrb[0].mxu0
      %v1649 = vadd.f32 0.0, %v1648
      %v1650 = vpop.f32.mrb[0].mxu0
      %v1651 = vpop.f32.mrb[0].mxu0
      %v1652 = vadd.f32 0.0, %v1651
      %v1653 = vpop.f32.mrb[0].mxu0
      %1654 = vdwg.mxu0
      %v1655 = vadd.f32 %v1543, %v1649
      %v1656 = vadd.f32 %v1544, %v1652
      %s1657 = scalar_lea.vmem %s2, 576
      %v1658 = vld [vmem:[%s1657] sm:$0xf]
      %v1659 = vld [vmem:[%s1657 + $0x4] sm:$0xf]
      %v1660 = vld [vmem:[%s1657 + $0x8] sm:$0xf]
      %v1661 = vld [vmem:[%s1657 + $0xc] sm:$0xf]
      %v1662 = vld [vmem:[%s1657 + $0x10] sm:$0xf]
      %v1663 = vld [vmem:[%s1657 + $0x14] sm:$0xf]
      %v1664 = vld [vmem:[%s1657 + $0x18] sm:$0xf]
      %v1665 = vld [vmem:[%s1657 + $0x1c] sm:$0xf]
      %v1666 = vld [vmem:[%s1657 + $0x20] sm:$0xf]
      %v1667 = vld [vmem:[%s1657 + $0x24] sm:$0xf]
      %v1668 = vld [vmem:[%s1657 + $0x28] sm:$0xf]
      %v1669 = vld [vmem:[%s1657 + $0x2c] sm:$0xf]
      %v1670 = vld [vmem:[%s1657 + $0x30] sm:$0xf]
      %v1671 = vld [vmem:[%s1657 + $0x34] sm:$0xf]
      %v1672 = vld [vmem:[%s1657 + $0x38] sm:$0xf]
      %v1673 = vld [vmem:[%s1657 + $0x3c] sm:$0xf]
      %v1674 = vrot.slane %v1213, 2
      %v1692 = vunpack.c.l.b16 %v1658
      %v1693 = vunpack.c.l.b16 %v1659
      %v1694 = vunpack.c.l.b16 %v1660
      %v1695 = vunpack.c.l.b16 %v1661
      %v1696 = vunpack.c.l.b16 %v1662
      %v1697 = vunpack.c.l.b16 %v1663
      %v1698 = vunpack.c.l.b16 %v1664
      %v1699 = vunpack.c.l.b16 %v1665
      %v1700 = vunpack.c.l.b16 %v1666
      %v1701 = vunpack.c.l.b16 %v1667
      %v1702 = vunpack.c.l.b16 %v1668
      %v1703 = vunpack.c.l.b16 %v1669
      %v1704 = vunpack.c.l.b16 %v1670
      %v1705 = vunpack.c.l.b16 %v1671
      %v1706 = vunpack.c.l.b16 %v1672
      %v1707 = vunpack.c.l.b16 %v1673
      %v1708 = vpack.c.b16 %v1693, %v1692
      %v1709 = vpack.c.b16 %v1695, %v1694
      %v1710 = vpack.c.b16 %v1697, %v1696
      %v1711 = vpack.c.b16 %v1699, %v1698
      %v1712 = vpack.c.b16 %v1701, %v1700
      %v1713 = vpack.c.b16 %v1703, %v1702
      %v1714 = vpack.c.b16 %v1705, %v1704
      %v1715 = vpack.c.b16 %v1707, %v1706
      %1724 = vmatprep.subr.bf16.mxu0 0
      %1725 = vmatpush1.bf16.msra.mxu0 %v1708
      %1726 = vmatprep.subr.bf16.mxu0 0
      %1727 = vmatpush1.bf16.msra.mxu0 %v1709
      %1728 = vmatprep.subr.bf16.mxu0 0
      %1729 = vmatpush1.bf16.msra.mxu0 %v1710
      %1730 = vmatprep.subr.bf16.mxu0 0
      %1731 = vmatpush1.bf16.msra.mxu0 %v1711
      %1732 = vmatprep.subr.bf16.mxu0 0
      %1733 = vmatpush1.bf16.msra.mxu0 %v1712
      %1734 = vmatprep.subr.bf16.mxu0 0
      %1735 = vmatpush1.bf16.msra.mxu0 %v1713
      %1736 = vmatprep.subr.bf16.mxu0 0
      %1737 = vmatpush1.bf16.msra.mxu0 %v1714
      %1738 = vmatprep.subr.bf16.mxu0 0
      %1739 = vmatpush1.bf16.msra.mxu0 %v1715
      %1740 = vmatprep.subr.bf16.mxu0 0
      %1741 = vmatpush1.bf16.msra.mxu0 0
      %1742 = vmatprep.subr.bf16.mxu0 0
      %1743 = vmatpush1.bf16.msra.mxu0 0
      %1744 = vmatprep.subr.bf16.mxu0 0
      %1745 = vmatpush1.bf16.msra.mxu0 0
      %1746 = vmatprep.subr.bf16.mxu0 0
      %1747 = vmatpush1.bf16.msra.mxu0 0
      %1748 = vmatprep.subr.bf16.mxu0 0
      %1749 = vmatpush1.bf16.msra.mxu0 0
      %1750 = vmatprep.subr.bf16.mxu0 0
      %1751 = vmatpush1.bf16.msra.mxu0 0
      %1752 = vmatprep.subr.bf16.mxu0 0
      %1753 = vmatpush1.bf16.msra.mxu0 0
      %1754 = vmatprep.subr.bf16.mxu0 0
      %1755 = vmatpush1.bf16.msra.mxu0 0
      %1756 = vmatprep.mubr.bf16.mxu0 0
      %1757 = vmatmul.mubr.bf16.gmra.mrb[0].mxu0 %v1674
      %v1758 = vpop.f32.mrb[0].mxu0
      %v1759 = vadd.f32 0.0, %v1758
      %v1760 = vpop.f32.mrb[0].mxu0
      %v1761 = vpop.f32.mrb[0].mxu0
      %v1762 = vadd.f32 0.0, %v1761
      %v1763 = vpop.f32.mrb[0].mxu0
      %1764 = vdwg.mxu0
      %v1765 = vadd.f32 %v1655, %v1759
      %v1766 = vadd.f32 %v1656, %v1762
      %s1767 = scalar_lea.vmem %s3, 1
      %v1768 = vld [vmem:[%s1767] sm:$0x1]
      %v1770 = vlaneseq
      %v1771 = vshrl.u32 %v1770, 7
      %v1772 = vsub.s32 0, %v1771
      %v1773 = vrot.slane %v1768, %v1772
      %v1775 = vadd.f32 %v1765, %v1773
      %v1776 = vadd.f32 %v1766, %v1773
      %vm1777 = vcmp.gt.f32.partialorder %v1775, 0.0
      %vm1778 = vcmp.gt.f32.partialorder %v1776, 0.0
      %v1779 = vmul.f32 %v1775, 0.01
      %v1780 = vmul.f32 %v1776, 0.01
      %v1781 = vsel %vm1777, %v1775, %v1779
      %v1782 = vsel %vm1778, %v1776, %v1780
      %v1783 = vpack.c.bf16 %v1782, %v1781
      %s1784 = scalar_lea.vmem %s4, 192
      %v1785 = vld [vmem:[%s1784] sm:$0xf]
      %v1786 = vld [vmem:[%s1784 + $0x4] sm:$0xf]
      %v1787 = vld [vmem:[%s1784 + $0x8] sm:$0xf]
      %v1788 = vld [vmem:[%s1784 + $0xc] sm:$0xf]
      %v1789 = vld [vmem:[%s1784 + $0x10] sm:$0xf]
      %v1790 = vld [vmem:[%s1784 + $0x14] sm:$0xf]
      %v1791 = vld [vmem:[%s1784 + $0x18] sm:$0xf]
      %v1792 = vld [vmem:[%s1784 + $0x1c] sm:$0xf]
      %v1793 = vld [vmem:[%s1784 + $0x20] sm:$0xf]
      %v1794 = vld [vmem:[%s1784 + $0x24] sm:$0xf]
      %v1795 = vld [vmem:[%s1784 + $0x28] sm:$0xf]
      %v1796 = vld [vmem:[%s1784 + $0x2c] sm:$0xf]
      %v1797 = vld [vmem:[%s1784 + $0x30] sm:$0xf]
      %v1798 = vld [vmem:[%s1784 + $0x34] sm:$0xf]
      %v1799 = vld [vmem:[%s1784 + $0x38] sm:$0xf]
      %v1800 = vld [vmem:[%s1784 + $0x3c] sm:$0xf]
      %s1801 = scalar_lea.vmem %s4, 256
      %v1802 = vld [vmem:[%s1801] sm:$0xf]
      %v1803 = vld [vmem:[%s1801 + $0x4] sm:$0xf]
      %v1804 = vld [vmem:[%s1801 + $0x8] sm:$0xf]
      %v1805 = vld [vmem:[%s1801 + $0xc] sm:$0xf]
      %v1806 = vld [vmem:[%s1801 + $0x10] sm:$0xf]
      %v1807 = vld [vmem:[%s1801 + $0x14] sm:$0xf]
      %v1808 = vld [vmem:[%s1801 + $0x18] sm:$0xf]
      %v1809 = vld [vmem:[%s1801 + $0x1c] sm:$0xf]
      %v1810 = vld [vmem:[%s1801 + $0x20] sm:$0xf]
      %v1811 = vld [vmem:[%s1801 + $0x24] sm:$0xf]
      %v1812 = vld [vmem:[%s1801 + $0x28] sm:$0xf]
      %v1813 = vld [vmem:[%s1801 + $0x2c] sm:$0xf]
      %v1814 = vld [vmem:[%s1801 + $0x30] sm:$0xf]
      %v1815 = vld [vmem:[%s1801 + $0x34] sm:$0xf]
      %v1816 = vld [vmem:[%s1801 + $0x38] sm:$0xf]
      %v1817 = vld [vmem:[%s1801 + $0x3c] sm:$0xf]
      %v1819 = vshrl.u32 %v1783, 16
      %v1821 = vshll.u32 %v1783, 16
      %v1823 = vrot.slane %v1821, 1
      %v1824 = vor.u32 %v1819, %v1823
      %v1842 = vunpack.c.l.b16 %v1802
      %v1843 = vunpack.c.l.b16 %v1803
      %v1844 = vunpack.c.l.b16 %v1804
      %v1845 = vunpack.c.l.b16 %v1805
      %v1846 = vunpack.c.l.b16 %v1806
      %v1847 = vunpack.c.l.b16 %v1807
      %v1848 = vunpack.c.l.b16 %v1808
      %v1849 = vunpack.c.l.b16 %v1809
      %v1850 = vunpack.c.l.b16 %v1810
      %v1851 = vunpack.c.l.b16 %v1811
      %v1852 = vunpack.c.l.b16 %v1812
      %v1853 = vunpack.c.l.b16 %v1813
      %v1854 = vunpack.c.l.b16 %v1814
      %v1855 = vunpack.c.l.b16 %v1815
      %v1856 = vunpack.c.l.b16 %v1816
      %v1857 = vunpack.c.l.b16 %v1817
      %v1858 = vpack.c.b16 %v1843, %v1842
      %v1859 = vpack.c.b16 %v1845, %v1844
      %v1860 = vpack.c.b16 %v1847, %v1846
      %v1861 = vpack.c.b16 %v1849, %v1848
      %v1862 = vpack.c.b16 %v1851, %v1850
      %v1863 = vpack.c.b16 %v1853, %v1852
      %v1864 = vpack.c.b16 %v1855, %v1854
      %v1865 = vpack.c.b16 %v1857, %v1856
      %1874 = vmatprep.subr.bf16.mxu0 0
      %1875 = vmatpush1.bf16.msra.mxu0 %v1858
      %1876 = vmatprep.subr.bf16.mxu0 0
      %1877 = vmatpush1.bf16.msra.mxu0 %v1859
      %1878 = vmatprep.subr.bf16.mxu0 0
      %1879 = vmatpush1.bf16.msra.mxu0 %v1860
      %1880 = vmatprep.subr.bf16.mxu0 0
      %1881 = vmatpush1.bf16.msra.mxu0 %v1861
      %1882 = vmatprep.subr.bf16.mxu0 0
      %1883 = vmatpush1.bf16.msra.mxu0 %v1862
      %1884 = vmatprep.subr.bf16.mxu0 0
      %1885 = vmatpush1.bf16.msra.mxu0 %v1863
      %1886 = vmatprep.subr.bf16.mxu0 0
      %1887 = vmatpush1.bf16.msra.mxu0 %v1864
      %1888 = vmatprep.subr.bf16.mxu0 0
      %1889 = vmatpush1.bf16.msra.mxu0 %v1865
      %1890 = vmatprep.subr.bf16.mxu0 0
      %1891 = vmatpush1.bf16.msra.mxu0 0
      %1892 = vmatprep.subr.bf16.mxu0 0
      %1893 = vmatpush1.bf16.msra.mxu0 0
      %1894 = vmatprep.subr.bf16.mxu0 0
      %1895 = vmatpush1.bf16.msra.mxu0 0
      %1896 = vmatprep.subr.bf16.mxu0 0
      %1897 = vmatpush1.bf16.msra.mxu0 0
      %1898 = vmatprep.subr.bf16.mxu0 0
      %1899 = vmatpush1.bf16.msra.mxu0 0
      %1900 = vmatprep.subr.bf16.mxu0 0
      %1901 = vmatpush1.bf16.msra.mxu0 0
      %1902 = vmatprep.subr.bf16.mxu0 0
      %1903 = vmatpush1.bf16.msra.mxu0 0
      %1904 = vmatprep.subr.bf16.mxu0 0
      %1905 = vmatpush1.bf16.msra.mxu0 0
      %1906 = vmatprep.mubr.bf16.mxu0 0
      %1907 = vmatmul.mubr.bf16.gmra.mrb[0].mxu0 %v1824
      %v1908 = vpop.f32.mrb[0].mxu0
      %v1909 = vadd.f32 0.0, %v1908
      %v1910 = vpop.f32.mrb[0].mxu0
      %v1911 = vpop.f32.mrb[0].mxu0
      %v1912 = vpop.f32.mrb[0].mxu0
      %1913 = vdwg.mxu0
      %v1930 = vunpack.c.l.b16 %v1785
      %v1931 = vunpack.c.l.b16 %v1786
      %v1932 = vunpack.c.l.b16 %v1787
      %v1933 = vunpack.c.l.b16 %v1788
      %v1934 = vunpack.c.l.b16 %v1789
      %v1935 = vunpack.c.l.b16 %v1790
      %v1936 = vunpack.c.l.b16 %v1791
      %v1937 = vunpack.c.l.b16 %v1792
      %v1938 = vunpack.c.l.b16 %v1793
      %v1939 = vunpack.c.l.b16 %v1794
      %v1940 = vunpack.c.l.b16 %v1795
      %v1941 = vunpack.c.l.b16 %v1796
      %v1942 = vunpack.c.l.b16 %v1797
      %v1943 = vunpack.c.l.b16 %v1798
      %v1944 = vunpack.c.l.b16 %v1799
      %v1945 = vunpack.c.l.b16 %v1800
      %v1946 = vpack.c.b16 %v1931, %v1930
      %v1947 = vpack.c.b16 %v1933, %v1932
      %v1948 = vpack.c.b16 %v1935, %v1934
      %v1949 = vpack.c.b16 %v1937, %v1936
      %v1950 = vpack.c.b16 %v1939, %v1938
      %v1951 = vpack.c.b16 %v1941, %v1940
      %v1952 = vpack.c.b16 %v1943, %v1942
      %v1953 = vpack.c.b16 %v1945, %v1944
      %1962 = vmatprep.subr.bf16.mxu0 0
      %1963 = vmatpush1.bf16.msra.mxu0 %v1946
      %1964 = vmatprep.subr.bf16.mxu0 0
      %1965 = vmatpush1.bf16.msra.mxu0 %v1947
      %1966 = vmatprep.subr.bf16.mxu0 0
      %1967 = vmatpush1.bf16.msra.mxu0 %v1948
      %1968 = vmatprep.subr.bf16.mxu0 0
      %1969 = vmatpush1.bf16.msra.mxu0 %v1949
      %1970 = vmatprep.subr.bf16.mxu0 0
      %1971 = vmatpush1.bf16.msra.mxu0 %v1950
      %1972 = vmatprep.subr.bf16.mxu0 0
      %1973 = vmatpush1.bf16.msra.mxu0 %v1951
      %1974 = vmatprep.subr.bf16.mxu0 0
      %1975 = vmatpush1.bf16.msra.mxu0 %v1952
      %1976 = vmatprep.subr.bf16.mxu0 0
      %1977 = vmatpush1.bf16.msra.mxu0 %v1953
      %1978 = vmatprep.subr.bf16.mxu0 0
      %1979 = vmatpush1.bf16.msra.mxu0 0
      %1980 = vmatprep.subr.bf16.mxu0 0
      %1981 = vmatpush1.bf16.msra.mxu0 0
      %1982 = vmatprep.subr.bf16.mxu0 0
      %1983 = vmatpush1.bf16.msra.mxu0 0
      %1984 = vmatprep.subr.bf16.mxu0 0
      %1985 = vmatpush1.bf16.msra.mxu0 0
      %1986 = vmatprep.subr.bf16.mxu0 0
      %1987 = vmatpush1.bf16.msra.mxu0 0
      %1988 = vmatprep.subr.bf16.mxu0 0
      %1989 = vmatpush1.bf16.msra.mxu0 0
      %1990 = vmatprep.subr.bf16.mxu0 0
      %1991 = vmatpush1.bf16.msra.mxu0 0
      %1992 = vmatprep.subr.bf16.mxu0 0
      %1993 = vmatpush1.bf16.msra.mxu0 0
      %1994 = vmatprep.mubr.bf16.mxu0 0
      %1995 = vmatmul.mubr.bf16.gmra.mrb[0].mxu0 %v1783
      %v1996 = vpop.f32.mrb[0].mxu0
      %v1997 = vadd.f32 %v1909, %v1996
      %v1998 = vpop.f32.mrb[0].mxu0
      %v1999 = vpop.f32.mrb[0].mxu0
      %v2000 = vpop.f32.mrb[0].mxu0
      %2001 = vdwg.mxu0
      %s2002 = scalar_lea.vmem %s4, 320
      %v2003 = vld [vmem:[%s2002] sm:$0xf]
      %v2004 = vld [vmem:[%s2002 + $0x4] sm:$0xf]
      %v2005 = vld [vmem:[%s2002 + $0x8] sm:$0xf]
      %v2006 = vld [vmem:[%s2002 + $0xc] sm:$0xf]
      %v2007 = vld [vmem:[%s2002 + $0x10] sm:$0xf]
      %v2008 = vld [vmem:[%s2002 + $0x14] sm:$0xf]
      %v2009 = vld [vmem:[%s2002 + $0x18] sm:$0xf]
      %v2010 = vld [vmem:[%s2002 + $0x1c] sm:$0xf]
      %v2011 = vld [vmem:[%s2002 + $0x20] sm:$0xf]
      %v2012 = vld [vmem:[%s2002 + $0x24] sm:$0xf]
      %v2013 = vld [vmem:[%s2002 + $0x28] sm:$0xf]
      %v2014 = vld [vmem:[%s2002 + $0x2c] sm:$0xf]
      %v2015 = vld [vmem:[%s2002 + $0x30] sm:$0xf]
      %v2016 = vld [vmem:[%s2002 + $0x34] sm:$0xf]
      %v2017 = vld [vmem:[%s2002 + $0x38] sm:$0xf]
      %v2018 = vld [vmem:[%s2002 + $0x3c] sm:$0xf]
      %v2020 = vrot.slane %v1783, 1
      %v2038 = vunpack.c.l.b16 %v2003
      %v2039 = vunpack.c.l.b16 %v2004
      %v2040 = vunpack.c.l.b16 %v2005
      %v2041 = vunpack.c.l.b16 %v2006
      %v2042 = vunpack.c.l.b16 %v2007
      %v2043 = vunpack.c.l.b16 %v2008
      %v2044 = vunpack.c.l.b16 %v2009
      %v2045 = vunpack.c.l.b16 %v2010
      %v2046 = vunpack.c.l.b16 %v2011
      %v2047 = vunpack.c.l.b16 %v2012
      %v2048 = vunpack.c.l.b16 %v2013
      %v2049 = vunpack.c.l.b16 %v2014
      %v2050 = vunpack.c.l.b16 %v2015
      %v2051 = vunpack.c.l.b16 %v2016
      %v2052 = vunpack.c.l.b16 %v2017
      %v2053 = vunpack.c.l.b16 %v2018
      %v2054 = vpack.c.b16 %v2039, %v2038
      %v2055 = vpack.c.b16 %v2041, %v2040
      %v2056 = vpack.c.b16 %v2043, %v2042
      %v2057 = vpack.c.b16 %v2045, %v2044
      %v2058 = vpack.c.b16 %v2047, %v2046
      %v2059 = vpack.c.b16 %v2049, %v2048
      %v2060 = vpack.c.b16 %v2051, %v2050
      %v2061 = vpack.c.b16 %v2053, %v2052
      %2070 = vmatprep.subr.bf16.mxu0 0
      %2071 = vmatpush1.bf16.msra.mxu0 %v2054
      %2072 = vmatprep.subr.bf16.mxu0 0
      %2073 = vmatpush1.bf16.msra.mxu0 %v2055
      %2074 = vmatprep.subr.bf16.mxu0 0
      %2075 = vmatpush1.bf16.msra.mxu0 %v2056
      %2076 = vmatprep.subr.bf16.mxu0 0
      %2077 = vmatpush1.bf16.msra.mxu0 %v2057
      %2078 = vmatprep.subr.bf16.mxu0 0
      %2079 = vmatpush1.bf16.msra.mxu0 %v2058
      %2080 = vmatprep.subr.bf16.mxu0 0
      %2081 = vmatpush1.bf16.msra.mxu0 %v2059
      %2082 = vmatprep.subr.bf16.mxu0 0
      %2083 = vmatpush1.bf16.msra.mxu0 %v2060
      %2084 = vmatprep.subr.bf16.mxu0 0
      %2085 = vmatpush1.bf16.msra.mxu0 %v2061
      %2086 = vmatprep.subr.bf16.mxu0 0
      %2087 = vmatpush1.bf16.msra.mxu0 0
      %2088 = vmatprep.subr.bf16.mxu0 0
      %2089 = vmatpush1.bf16.msra.mxu0 0
      %2090 = vmatprep.subr.bf16.mxu0 0
      %2091 = vmatpush1.bf16.msra.mxu0 0
      %2092 = vmatprep.subr.bf16.mxu0 0
      %2093 = vmatpush1.bf16.msra.mxu0 0
      %2094 = vmatprep.subr.bf16.mxu0 0
      %2095 = vmatpush1.bf16.msra.mxu0 0
      %2096 = vmatprep.subr.bf16.mxu0 0
      %2097 = vmatpush1.bf16.msra.mxu0 0
      %2098 = vmatprep.subr.bf16.mxu0 0
      %2099 = vmatpush1.bf16.msra.mxu0 0
      %2100 = vmatprep.subr.bf16.mxu0 0
      %2101 = vmatpush1.bf16.msra.mxu0 0
      %2102 = vmatprep.mubr.bf16.mxu0 0
      %2103 = vmatmul.mubr.bf16.gmra.mrb[0].mxu0 %v2020
      %v2104 = vpop.f32.mrb[0].mxu0
      %v2105 = vadd.f32 0.0, %v2104
      %v2106 = vpop.f32.mrb[0].mxu0
      %v2107 = vpop.f32.mrb[0].mxu0
      %v2108 = vpop.f32.mrb[0].mxu0
      %2109 = vdwg.mxu0
      %v2110 = vadd.f32 %v1997, %v2105
      %s2111 = scalar_lea.vmem %s5, 1
      %v2112 = vld [vmem:[%s2111] sm:$0x1]
      %v2114 = vlaneseq
      %v2115 = vshrl.u32 %v2114, 7
      %v2116 = vsub.s32 0, %v2115
      %v2117 = vrot.slane %v2112, %v2116
      %v2119 = vadd.f32 %v2110, %v2117
      %v2120 = vtanh.pop %v2119
      %2121 = vrot.lane.b32.xlu0 %v1183, 64
      %v2122 = vpop.permute.xlu0 %2121
      %v2123 = vadd.f32 %v2122, %v2120
      %2124 = vst [vmem:[%s266] sm:$0xff] %v2123
      %p2125 = scmp.lt.s32.totalorder %s17, 3
      %s2126 = scalar_select %p2125, %s17, 3
      %s2127 = smul.addr %s2126, 8
      %s2128 = scalar_lea.vmem %s6, %s2127
      // Predicated region
      $region45: #{interactor_level.1} parent=43 // pred_check
        %p2129 = pneg %p171
      $region46: #{interactor_level.1} parent=43 // pred_check_branch
        %2131 = sbr.rel (%p2129) target = $region48
      $region47: #{interactor_level.1} parent=43 // pred_region
        _
      $region48: #{interactor_level.1} parent=43 // pred_fallthru
        _
    $region44: #{interactor_level.1} parent=5 // pred_fallthru
      _
    %p2132 = scmp.le.s32.totalorder 2, %s12
    // Predicated region
    $region49: #{interactor_level.1} parent=5 // pred_check
      %p2133 = pneg %p2132
    $region50: #{interactor_level.1} parent=5 // pred_check_branch
      %2135 = sbr.rel (%p2133) target = $region52
    $region51: #{interactor_level.1} parent=5 // pred_region
      %s2136 = ssub.s32 %s12, 2
      // Predicated region
      $region53: #{interactor_level.1} parent=51 // pred_check
        %p2137 = pneg %p177
      $region54: #{interactor_level.1} parent=51 // pred_check_branch
        %2139 = sbr.rel (%p2137) target = $region56
      $region55: #{interactor_level.1} parent=51 // pred_region
        %p2140 = scmp.lt.s32.totalorder %s18, 3
        %s2141 = scalar_select %p2140, %s18, 3
        %s2142 = smul.addr %s2141, 8
        %s2143 = scalar_lea.vmem %s6, %s2142
      $region56: #{interactor_level.1} parent=51 // pred_fallthru
        _
    $region52: #{interactor_level.1} parent=5 // pred_fallthru
      _
  $region6: #{interactor_level.1} parent=0 // loop_footer
    %s16 = sadd.s32 1, %s12
  $region7: #{interactor_level.1} parent=0 // loop_footer_branch
    %11 = sbr.rel target = $region3
  $region8: #{interactor_level.1} parent=0 // loop_exit
    _

</llo_original>
